<compile_context>
chip_gen: v7x
topology: tpu7x:2x2x1
jax: 0.10.0
libtpu: 0.0.40
codegen_flags: <defaults>
</compile_context>

<pallas_src>
import functools

import jax
import jax.numpy as jnp
from jax.experimental import pallas as pl
from jax.experimental.pallas import tpu as pltpu


def _make_rnn_kernel(num_layers, seq_len, batch, hidden):
    """Kernel body for static (num_layers, T, B, H)."""
    T, B, H, L = seq_len, batch, hidden, num_layers

    def kernel(*args):
        # args layout:
        #   x_ref (B*T, I)                       rows in b*T + t order
        #   w_ih0 (I, H), w_hh0 (H, H), b0 (1, H)
        #   [w_ih_l (H, H), w_hh_l (H, H), b_l (1, H)]  for l = 1..L-1
        #   w_fc (H, O), b_fc (1, O)
        #   out_ref (B*T, O)                     rows in b*T + t order
        #   hn_ref (L, B, H)
        x_ref = args[0]
        wih0_ref, whh0_ref, b0_ref = args[1], args[2], args[3]
        idx = 4
        upper_refs = []
        for _ in range(L - 1):
            upper_refs.append((args[idx], args[idx + 1], args[idx + 2]))
            idx += 3
        wfc_ref, bfc_ref = args[idx], args[idx + 1]
        out_ref, hn_ref = args[idx + 2], args[idx + 3]

        # Hoist all weight loads and bias broadcasts out of the unrolled loop.
        whh0 = whh0_ref[...]
        upper_w = [
            (wih_r[...], whh_r[...], jnp.broadcast_to(b_r[...], (B, H)))
            for (wih_r, whh_r, b_r) in upper_refs
        ]

        # Hoisted layer-0 input projection for every (b, t) row at once; rows
        # stay in the b-major (b*T + t) order of x, bias folded in here once.
        proj0 = (
            jnp.dot(x_ref[...], wih0_ref[...], preferred_element_type=jnp.float32)
            + b0_ref[...]
        )  # (B*T, H)

        # h_0 = zeros (PyTorch default when no initial hidden state is given).
        h = [jnp.zeros((B, H), jnp.float32) for _ in range(L)]
        outs = []  # last-layer hidden per timestep, kept in vregs

        # Fully-unrolled recurrence over time (T is static and small).
        for t in range(T):
            # Gather this timestep's B rows of proj0 (row b*T + t).  Static
            # slices + sublane concat; not on the recurrence dependency chain.
            xt = jnp.concatenate(
                [proj0[b * T + t:b * T + t + 1, :] for b in range(B)], axis=0
            )  # (B, H)
            h0 = jnp.tanh(
                xt + jnp.dot(h[0], whh0, preferred_element_type=jnp.float32)
            )
            h[0] = h0
            prev = h0
            for l in range(1, L):
                wih_l, whh_l, b_l = upper_w[l - 1]
                hl = jnp.tanh(
                    jnp.dot(prev, wih_l, preferred_element_type=jnp.float32)
                    + jnp.dot(h[l], whh_l, preferred_element_type=jnp.float32)
                    + b_l
                )
                h[l] = hl
                prev = hl
            outs.append(prev)

        # Final hidden state, each slice written exactly once.
        for l in range(L):
            hn_ref[l] = h[l]

        # Assemble the fc input directly in b*T + t row order (matching
        # output.contiguous().view(-1, H)) from the staged vregs, then do the
        # deferred fc as a single matmul and a single output store.
        fc_in = jnp.concatenate(
            [outs[t][b:b + 1, :] for b in range(B) for t in range(T)], axis=0
        )  # (B*T, H)
        out_ref[...] = (
            jnp.dot(fc_in, wfc_ref[...], preferred_element_type=jnp.float32)
            + bfc_ref[...]
        )

    return kernel


@functools.partial(jax.jit, static_argnames=("num_layers",))
def rnn_model_forward(x, params, num_layers):
    """x: (B, T, input_size) float32, batch_first like the PyTorch module."""
    B, T, I = x.shape
    H = params["w_hh"][0].shape[0]
    O = params["w_fc"].shape[1]

    # Contiguous batch_first flatten: row index = b*T + t.  No transpose HLO.
    x_flat = x.reshape(B * T, I)

    inputs = [x_flat, params["w_ih"][0], params["w_hh"][0], params["b"][0]]
    for l in range(1, num_layers):
        inputs += [params["w_ih"][l], params["w_hh"][l], params["b"][l]]
    inputs += [params["w_fc"], params["b_fc"]]

    def full_spec(arr):
        nd = arr.ndim
        return pl.BlockSpec(arr.shape, lambda i, _nd=nd: (0,) * _nd)

    in_specs = [full_spec(a) for a in inputs]

    out_shapes = (
        jax.ShapeDtypeStruct((B * T, O), jnp.float32),          # fc out, b*T+t rows
        jax.ShapeDtypeStruct((num_layers, B, H), jnp.float32),  # final hidden
    )
    out_specs = (
        pl.BlockSpec((B * T, O), lambda i: (0, 0)),
        pl.BlockSpec((num_layers, B, H), lambda i: (0, 0, 0)),
    )

    output, hidden = pl.pallas_call(
        _make_rnn_kernel(num_layers, T, B, H),
        out_shape=out_shapes,
        grid_spec=pltpu.PrefetchScalarGridSpec(
            num_scalar_prefetch=0,
            grid=(1,),
            in_specs=in_specs,
            out_specs=out_specs,
        ),
        compiler_params=pltpu.CompilerParams(
            dimension_semantics=("arbitrary",)  # single sequential invocation
        ),
    )(*inputs)

    return output, hidden


def init_params(key, input_size, hidden_size, output_size, num_layers):
    """Deterministic uniform(-1/sqrt(H), 1/sqrt(H)) init, mirroring nn.RNN/Linear."""
    bound = 1.0 / jnp.sqrt(jnp.float32(hidden_size))
    keys = jax.random.split(key, 4 * num_layers + 2)
    w_ih, w_hh, b = [], [], []
    k = 0
    for l in range(num_layers):
        in_dim = input_size if l == 0 else hidden_size
        w_ih.append(jax.random.uniform(keys[k], (in_dim, hidden_size),
                                       jnp.float32, -bound, bound)); k += 1
        w_hh.append(jax.random.uniform(keys[k], (hidden_size, hidden_size),
                                       jnp.float32, -bound, bound)); k += 1
        b_ih = jax.random.uniform(keys[k], (1, hidden_size),
                                  jnp.float32, -bound, bound); k += 1
        b_hh = jax.random.uniform(keys[k], (1, hidden_size),
                                  jnp.float32, -bound, bound); k += 1
        b.append(b_ih + b_hh)  # biases always appear summed in the update
    w_fc = jax.random.uniform(keys[k], (hidden_size, output_size),
                              jnp.float32, -bound, bound); k += 1
    b_fc = jax.random.uniform(keys[k], (1, output_size),
                              jnp.float32, -bound, bound)
    return {"w_ih": w_ih, "w_hh": w_hh, "b": b, "w_fc": w_fc, "b_fc": b_fc}


def reference_forward(x, params, num_layers):
    """Pure-JAX reference with identical semantics (for correctness check)."""
    B, T, I = x.shape
    H = params["w_hh"][0].shape[0]
    h = jnp.zeros((num_layers, B, H), jnp.float32)
    outs = []
    for t in range(T):
        inp = x[:, t, :]
        new_h = []
        for l in range(num_layers):
            hl = jnp.tanh(inp @ params["w_ih"][l] + h[l] @ params["w_hh"][l]
                          + params["b"][l])
            new_h.append(hl)
            inp = hl
        h = jnp.stack(new_h, axis=0)
        outs.append(inp)
    rnn_out = jnp.stack(outs, axis=1)  # (B, T, H)
    flat = rnn_out.reshape(B * T, H)
    return flat @ params["w_fc"] + params["b_fc"], h


if __name__ == "__main__":
    input_size, hidden_size, output_size, num_layers = 8, 32, 4, 2
    B, T = 2, 8

    key = jax.random.PRNGKey(0)
    k_x, k_p = jax.random.split(key)
    x = jax.random.normal(k_x, (B, T, input_size), jnp.float32)
    params = init_params(k_p, input_size, hidden_size, output_size, num_layers)

    out, hidden = rnn_model_forward(x, params, num_layers)
    out = jax.block_until_ready(out)
    hidden = jax.block_until_ready(hidden)

    ref_out, ref_hidden = reference_forward(x, params, num_layers)

    assert out.shape == (B * T, output_size), out.shape
    assert hidden.shape == (num_layers, B, hidden_size), hidden.shape
    # All-f32 pipeline: tight tolerance (small margin only for tanh
    # approximation differences between Mosaic and XLA lowerings).
    assert jnp.allclose(out, ref_out, rtol=1e-4, atol=1e-5)
    assert jnp.allclose(hidden, ref_hidden, rtol=1e-4, atol=1e-5)

    print("KERNEL_OK")
</pallas_src>

<mosaic_0001>
module attributes {stable_mosaic.version = 11 : i64} {
  func.func @kernel(%arg0: i32, %arg1: memref<16x8xf32, #tpu.memory_space<vmem>>, %arg2: memref<8x32xf32, #tpu.memory_space<vmem>>, %arg3: memref<32x32xf32, #tpu.memory_space<vmem>>, %arg4: memref<1x32xf32, #tpu.memory_space<vmem>>, %arg5: memref<32x32xf32, #tpu.memory_space<vmem>>, %arg6: memref<32x32xf32, #tpu.memory_space<vmem>>, %arg7: memref<1x32xf32, #tpu.memory_space<vmem>>, %arg8: memref<32x4xf32, #tpu.memory_space<vmem>>, %arg9: memref<1x4xf32, #tpu.memory_space<vmem>>, %arg10: memref<16x4xf32, #tpu.memory_space<vmem>>, %arg11: memref<2x2x32xf32, #tpu.memory_space<vmem>>) attributes {dimension_semantics = [#tpu.dimension_semantics<arbitrary>], iteration_bounds = array<i64: 1>, scalar_prefetch = 0 : i64, scratch_operands = 0 : i64, tpu.core_type = #tpu.core_type<tc>, window_params = [{pipeline_mode = #tpu.pipeline_mode<synchronous>, transform_indices = @transform_0, window_bounds = array<i64: 16, 8>}, {pipeline_mode = #tpu.pipeline_mode<synchronous>, transform_indices = @transform_1, window_bounds = array<i64: 8, 32>}, {pipeline_mode = #tpu.pipeline_mode<synchronous>, transform_indices = @transform_2, window_bounds = array<i64: 32, 32>}, {pipeline_mode = #tpu.pipeline_mode<synchronous>, transform_indices = @transform_3, window_bounds = array<i64: 1, 32>}, {pipeline_mode = #tpu.pipeline_mode<synchronous>, transform_indices = @transform_4, window_bounds = array<i64: 32, 32>}, {pipeline_mode = #tpu.pipeline_mode<synchronous>, transform_indices = @transform_5, window_bounds = array<i64: 32, 32>}, {pipeline_mode = #tpu.pipeline_mode<synchronous>, transform_indices = @transform_6, window_bounds = array<i64: 1, 32>}, {pipeline_mode = #tpu.pipeline_mode<synchronous>, transform_indices = @transform_7, window_bounds = array<i64: 32, 4>}, {pipeline_mode = #tpu.pipeline_mode<synchronous>, transform_indices = @transform_8, window_bounds = array<i64: 1, 4>}, {pipeline_mode = #tpu.pipeline_mode<synchronous>, transform_indices = @transform_9, window_bounds = array<i64: 16, 4>}, {pipeline_mode = #tpu.pipeline_mode<synchronous>, transform_indices = @transform_10, window_bounds = array<i64: 2, 2, 32>}]} {
    %c0 = arith.constant 0 : index
    %c0_0 = arith.constant 0 : index
    %0 = vector.load %arg3[%c0, %c0_0] : memref<32x32xf32, #tpu.memory_space<vmem>>, vector<32x32xf32>
    %c0_1 = arith.constant 0 : index
    %c0_2 = arith.constant 0 : index
    %1 = vector.load %arg5[%c0_1, %c0_2] : memref<32x32xf32, #tpu.memory_space<vmem>>, vector<32x32xf32>
    %c0_3 = arith.constant 0 : index
    %c0_4 = arith.constant 0 : index
    %2 = vector.load %arg6[%c0_3, %c0_4] : memref<32x32xf32, #tpu.memory_space<vmem>>, vector<32x32xf32>
    %c0_5 = arith.constant 0 : index
    %c0_6 = arith.constant 0 : index
    %3 = vector.load %arg7[%c0_5, %c0_6] : memref<1x32xf32, #tpu.memory_space<vmem>>, vector<1x32xf32>
    %4 = vector.shape_cast %3 : vector<1x32xf32> to vector<1x32xf32>
    %5 = vector.broadcast %4 : vector<1x32xf32> to vector<2x32xf32>
    %c0_7 = arith.constant 0 : index
    %c0_8 = arith.constant 0 : index
    %6 = vector.load %arg1[%c0_7, %c0_8] : memref<16x8xf32, #tpu.memory_space<vmem>>, vector<16x8xf32>
    %c0_9 = arith.constant 0 : index
    %c0_10 = arith.constant 0 : index
    %7 = vector.load %arg2[%c0_9, %c0_10] : memref<8x32xf32, #tpu.memory_space<vmem>>, vector<8x32xf32>
    %cst = arith.constant dense<0.000000e+00> : vector<16x32xf32>
    %8 = tpu.matmul %6, %7, %cst {dimension_numbers = #tpu.dot_dimension_numbers<[1], [0], [0], [1], [0, 0, 1, 1], [], []>} : vector<16x8xf32>, vector<8x32xf32>, vector<16x32xf32> -> vector<16x32xf32>
    %c0_11 = arith.constant 0 : index
    %c0_12 = arith.constant 0 : index
    %9 = vector.load %arg4[%c0_11, %c0_12] : memref<1x32xf32, #tpu.memory_space<vmem>>, vector<1x32xf32>
    %10 = vector.broadcast %9 : vector<1x32xf32> to vector<16x32xf32>
    %11 = arith.addf %8, %10 : vector<16x32xf32>
    %cst_13 = arith.constant 0.000000e+00 : f32
    %12 = vector.broadcast %cst_13 : f32 to vector<2x32xf32>
    %cst_14 = arith.constant 0.000000e+00 : f32
    %13 = vector.broadcast %cst_14 : f32 to vector<2x32xf32>
    %14 = vector.extract_strided_slice %11 {offsets = [0, 0], sizes = [1, 32], strides = [1, 1]} : vector<16x32xf32> to vector<1x32xf32>
    %15 = vector.extract_strided_slice %11 {offsets = [8, 0], sizes = [1, 32], strides = [1, 1]} : vector<16x32xf32> to vector<1x32xf32>
    %16 = tpu.concatenate %14, %15 in 0 : vector<1x32xf32>, vector<1x32xf32> -> vector<2x32xf32>
    %cst_15 = arith.constant dense<0.000000e+00> : vector<2x32xf32>
    %17 = tpu.matmul %12, %0, %cst_15 {dimension_numbers = #tpu.dot_dimension_numbers<[1], [0], [0], [1], [0, 0, 1, 1], [], []>} : vector<2x32xf32>, vector<32x32xf32>, vector<2x32xf32> -> vector<2x32xf32>
    %18 = arith.addf %16, %17 : vector<2x32xf32>
    %19 = math.tanh %18 : vector<2x32xf32>
    %cst_16 = arith.constant dense<0.000000e+00> : vector<2x32xf32>
    %20 = tpu.matmul %19, %1, %cst_16 {dimension_numbers = #tpu.dot_dimension_numbers<[1], [0], [0], [1], [0, 0, 1, 1], [], []>} : vector<2x32xf32>, vector<32x32xf32>, vector<2x32xf32> -> vector<2x32xf32>
    %cst_17 = arith.constant dense<0.000000e+00> : vector<2x32xf32>
    %21 = tpu.matmul %13, %2, %cst_17 {dimension_numbers = #tpu.dot_dimension_numbers<[1], [0], [0], [1], [0, 0, 1, 1], [], []>} : vector<2x32xf32>, vector<32x32xf32>, vector<2x32xf32> -> vector<2x32xf32>
    %22 = arith.addf %20, %21 : vector<2x32xf32>
    %23 = arith.addf %22, %5 : vector<2x32xf32>
    %24 = math.tanh %23 : vector<2x32xf32>
    %25 = vector.extract_strided_slice %11 {offsets = [1, 0], sizes = [1, 32], strides = [1, 1]} : vector<16x32xf32> to vector<1x32xf32>
    %26 = vector.extract_strided_slice %11 {offsets = [9, 0], sizes = [1, 32], strides = [1, 1]} : vector<16x32xf32> to vector<1x32xf32>
    %27 = tpu.concatenate %25, %26 in 0 : vector<1x32xf32>, vector<1x32xf32> -> vector<2x32xf32>
    %cst_18 = arith.constant dense<0.000000e+00> : vector<2x32xf32>
    %28 = tpu.matmul %19, %0, %cst_18 {dimension_numbers = #tpu.dot_dimension_numbers<[1], [0], [0], [1], [0, 0, 1, 1], [], []>} : vector<2x32xf32>, vector<32x32xf32>, vector<2x32xf32> -> vector<2x32xf32>
    %29 = arith.addf %27, %28 : vector<2x32xf32>
    %30 = math.tanh %29 : vector<2x32xf32>
    %cst_19 = arith.constant dense<0.000000e+00> : vector<2x32xf32>
    %31 = tpu.matmul %30, %1, %cst_19 {dimension_numbers = #tpu.dot_dimension_numbers<[1], [0], [0], [1], [0, 0, 1, 1], [], []>} : vector<2x32xf32>, vector<32x32xf32>, vector<2x32xf32> -> vector<2x32xf32>
    %cst_20 = arith.constant dense<0.000000e+00> : vector<2x32xf32>
    %32 = tpu.matmul %24, %2, %cst_20 {dimension_numbers = #tpu.dot_dimension_numbers<[1], [0], [0], [1], [0, 0, 1, 1], [], []>} : vector<2x32xf32>, vector<32x32xf32>, vector<2x32xf32> -> vector<2x32xf32>
    %33 = arith.addf %31, %32 : vector<2x32xf32>
    %34 = arith.addf %33, %5 : vector<2x32xf32>
    %35 = math.tanh %34 : vector<2x32xf32>
    %36 = vector.extract_strided_slice %11 {offsets = [2, 0], sizes = [1, 32], strides = [1, 1]} : vector<16x32xf32> to vector<1x32xf32>
    %37 = vector.extract_strided_slice %11 {offsets = [10, 0], sizes = [1, 32], strides = [1, 1]} : vector<16x32xf32> to vector<1x32xf32>
    %38 = tpu.concatenate %36, %37 in 0 : vector<1x32xf32>, vector<1x32xf32> -> vector<2x32xf32>
    %cst_21 = arith.constant dense<0.000000e+00> : vector<2x32xf32>
    %39 = tpu.matmul %30, %0, %cst_21 {dimension_numbers = #tpu.dot_dimension_numbers<[1], [0], [0], [1], [0, 0, 1, 1], [], []>} : vector<2x32xf32>, vector<32x32xf32>, vector<2x32xf32> -> vector<2x32xf32>
    %40 = arith.addf %38, %39 : vector<2x32xf32>
    %41 = math.tanh %40 : vector<2x32xf32>
    %cst_22 = arith.constant dense<0.000000e+00> : vector<2x32xf32>
    %42 = tpu.matmul %41, %1, %cst_22 {dimension_numbers = #tpu.dot_dimension_numbers<[1], [0], [0], [1], [0, 0, 1, 1], [], []>} : vector<2x32xf32>, vector<32x32xf32>, vector<2x32xf32> -> vector<2x32xf32>
    %cst_23 = arith.constant dense<0.000000e+00> : vector<2x32xf32>
    %43 = tpu.matmul %35, %2, %cst_23 {dimension_numbers = #tpu.dot_dimension_numbers<[1], [0], [0], [1], [0, 0, 1, 1], [], []>} : vector<2x32xf32>, vector<32x32xf32>, vector<2x32xf32> -> vector<2x32xf32>
    %44 = arith.addf %42, %43 : vector<2x32xf32>
    %45 = arith.addf %44, %5 : vector<2x32xf32>
    %46 = math.tanh %45 : vector<2x32xf32>
    %47 = vector.extract_strided_slice %11 {offsets = [3, 0], sizes = [1, 32], strides = [1, 1]} : vector<16x32xf32> to vector<1x32xf32>
    %48 = vector.extract_strided_slice %11 {offsets = [11, 0], sizes = [1, 32], strides = [1, 1]} : vector<16x32xf32> to vector<1x32xf32>
    %49 = tpu.concatenate %47, %48 in 0 : vector<1x32xf32>, vector<1x32xf32> -> vector<2x32xf32>
    %cst_24 = arith.constant dense<0.000000e+00> : vector<2x32xf32>
    %50 = tpu.matmul %41, %0, %cst_24 {dimension_numbers = #tpu.dot_dimension_numbers<[1], [0], [0], [1], [0, 0, 1, 1], [], []>} : vector<2x32xf32>, vector<32x32xf32>, vector<2x32xf32> -> vector<2x32xf32>
    %51 = arith.addf %49, %50 : vector<2x32xf32>
    %52 = math.tanh %51 : vector<2x32xf32>
    %cst_25 = arith.constant dense<0.000000e+00> : vector<2x32xf32>
    %53 = tpu.matmul %52, %1, %cst_25 {dimension_numbers = #tpu.dot_dimension_numbers<[1], [0], [0], [1], [0, 0, 1, 1], [], []>} : vector<2x32xf32>, vector<32x32xf32>, vector<2x32xf32> -> vector<2x32xf32>
    %cst_26 = arith.constant dense<0.000000e+00> : vector<2x32xf32>
    %54 = tpu.matmul %46, %2, %cst_26 {dimension_numbers = #tpu.dot_dimension_numbers<[1], [0], [0], [1], [0, 0, 1, 1], [], []>} : vector<2x32xf32>, vector<32x32xf32>, vector<2x32xf32> -> vector<2x32xf32>
    %55 = arith.addf %53, %54 : vector<2x32xf32>
    %56 = arith.addf %55, %5 : vector<2x32xf32>
    %57 = math.tanh %56 : vector<2x32xf32>
    %58 = vector.extract_strided_slice %11 {offsets = [4, 0], sizes = [1, 32], strides = [1, 1]} : vector<16x32xf32> to vector<1x32xf32>
    %59 = vector.extract_strided_slice %11 {offsets = [12, 0], sizes = [1, 32], strides = [1, 1]} : vector<16x32xf32> to vector<1x32xf32>
    %60 = tpu.concatenate %58, %59 in 0 : vector<1x32xf32>, vector<1x32xf32> -> vector<2x32xf32>
    %cst_27 = arith.constant dense<0.000000e+00> : vector<2x32xf32>
    %61 = tpu.matmul %52, %0, %cst_27 {dimension_numbers = #tpu.dot_dimension_numbers<[1], [0], [0], [1], [0, 0, 1, 1], [], []>} : vector<2x32xf32>, vector<32x32xf32>, vector<2x32xf32> -> vector<2x32xf32>
    %62 = arith.addf %60, %61 : vector<2x32xf32>
    %63 = math.tanh %62 : vector<2x32xf32>
    %cst_28 = arith.constant dense<0.000000e+00> : vector<2x32xf32>
    %64 = tpu.matmul %63, %1, %cst_28 {dimension_numbers = #tpu.dot_dimension_numbers<[1], [0], [0], [1], [0, 0, 1, 1], [], []>} : vector<2x32xf32>, vector<32x32xf32>, vector<2x32xf32> -> vector<2x32xf32>
    %cst_29 = arith.constant dense<0.000000e+00> : vector<2x32xf32>
    %65 = tpu.matmul %57, %2, %cst_29 {dimension_numbers = #tpu.dot_dimension_numbers<[1], [0], [0], [1], [0, 0, 1, 1], [], []>} : vector<2x32xf32>, vector<32x32xf32>, vector<2x32xf32> -> vector<2x32xf32>
    %66 = arith.addf %64, %65 : vector<2x32xf32>
    %67 = arith.addf %66, %5 : vector<2x32xf32>
    %68 = math.tanh %67 : vector<2x32xf32>
    %69 = vector.extract_strided_slice %11 {offsets = [5, 0], sizes = [1, 32], strides = [1, 1]} : vector<16x32xf32> to vector<1x32xf32>
    %70 = vector.extract_strided_slice %11 {offsets = [13, 0], sizes = [1, 32], strides = [1, 1]} : vector<16x32xf32> to vector<1x32xf32>
    %71 = tpu.concatenate %69, %70 in 0 : vector<1x32xf32>, vector<1x32xf32> -> vector<2x32xf32>
    %cst_30 = arith.constant dense<0.000000e+00> : vector<2x32xf32>
    %72 = tpu.matmul %63, %0, %cst_30 {dimension_numbers = #tpu.dot_dimension_numbers<[1], [0], [0], [1], [0, 0, 1, 1], [], []>} : vector<2x32xf32>, vector<32x32xf32>, vector<2x32xf32> -> vector<2x32xf32>
    %73 = arith.addf %71, %72 : vector<2x32xf32>
    %74 = math.tanh %73 : vector<2x32xf32>
    %cst_31 = arith.constant dense<0.000000e+00> : vector<2x32xf32>
    %75 = tpu.matmul %74, %1, %cst_31 {dimension_numbers = #tpu.dot_dimension_numbers<[1], [0], [0], [1], [0, 0, 1, 1], [], []>} : vector<2x32xf32>, vector<32x32xf32>, vector<2x32xf32> -> vector<2x32xf32>
    %cst_32 = arith.constant dense<0.000000e+00> : vector<2x32xf32>
    %76 = tpu.matmul %68, %2, %cst_32 {dimension_numbers = #tpu.dot_dimension_numbers<[1], [0], [0], [1], [0, 0, 1, 1], [], []>} : vector<2x32xf32>, vector<32x32xf32>, vector<2x32xf32> -> vector<2x32xf32>
    %77 = arith.addf %75, %76 : vector<2x32xf32>
    %78 = arith.addf %77, %5 : vector<2x32xf32>
    %79 = math.tanh %78 : vector<2x32xf32>
    %80 = vector.extract_strided_slice %11 {offsets = [6, 0], sizes = [1, 32], strides = [1, 1]} : vector<16x32xf32> to vector<1x32xf32>
    %81 = vector.extract_strided_slice %11 {offsets = [14, 0], sizes = [1, 32], strides = [1, 1]} : vector<16x32xf32> to vector<1x32xf32>
    %82 = tpu.concatenate %80, %81 in 0 : vector<1x32xf32>, vector<1x32xf32> -> vector<2x32xf32>
    %cst_33 = arith.constant dense<0.000000e+00> : vector<2x32xf32>
    %83 = tpu.matmul %74, %0, %cst_33 {dimension_numbers = #tpu.dot_dimension_numbers<[1], [0], [0], [1], [0, 0, 1, 1], [], []>} : vector<2x32xf32>, vector<32x32xf32>, vector<2x32xf32> -> vector<2x32xf32>
    %84 = arith.addf %82, %83 : vector<2x32xf32>
    %85 = math.tanh %84 : vector<2x32xf32>
    %cst_34 = arith.constant dense<0.000000e+00> : vector<2x32xf32>
    %86 = tpu.matmul %85, %1, %cst_34 {dimension_numbers = #tpu.dot_dimension_numbers<[1], [0], [0], [1], [0, 0, 1, 1], [], []>} : vector<2x32xf32>, vector<32x32xf32>, vector<2x32xf32> -> vector<2x32xf32>
    %cst_35 = arith.constant dense<0.000000e+00> : vector<2x32xf32>
    %87 = tpu.matmul %79, %2, %cst_35 {dimension_numbers = #tpu.dot_dimension_numbers<[1], [0], [0], [1], [0, 0, 1, 1], [], []>} : vector<2x32xf32>, vector<32x32xf32>, vector<2x32xf32> -> vector<2x32xf32>
    %88 = arith.addf %86, %87 : vector<2x32xf32>
    %89 = arith.addf %88, %5 : vector<2x32xf32>
    %90 = math.tanh %89 : vector<2x32xf32>
    %91 = vector.extract_strided_slice %11 {offsets = [7, 0], sizes = [1, 32], strides = [1, 1]} : vector<16x32xf32> to vector<1x32xf32>
    %92 = vector.extract_strided_slice %11 {offsets = [15, 0], sizes = [1, 32], strides = [1, 1]} : vector<16x32xf32> to vector<1x32xf32>
    %93 = tpu.concatenate %91, %92 in 0 : vector<1x32xf32>, vector<1x32xf32> -> vector<2x32xf32>
    %cst_36 = arith.constant dense<0.000000e+00> : vector<2x32xf32>
    %94 = tpu.matmul %85, %0, %cst_36 {dimension_numbers = #tpu.dot_dimension_numbers<[1], [0], [0], [1], [0, 0, 1, 1], [], []>} : vector<2x32xf32>, vector<32x32xf32>, vector<2x32xf32> -> vector<2x32xf32>
    %95 = arith.addf %93, %94 : vector<2x32xf32>
    %96 = math.tanh %95 : vector<2x32xf32>
    %cst_37 = arith.constant dense<0.000000e+00> : vector<2x32xf32>
    %97 = tpu.matmul %96, %1, %cst_37 {dimension_numbers = #tpu.dot_dimension_numbers<[1], [0], [0], [1], [0, 0, 1, 1], [], []>} : vector<2x32xf32>, vector<32x32xf32>, vector<2x32xf32> -> vector<2x32xf32>
    %cst_38 = arith.constant dense<0.000000e+00> : vector<2x32xf32>
    %98 = tpu.matmul %90, %2, %cst_38 {dimension_numbers = #tpu.dot_dimension_numbers<[1], [0], [0], [1], [0, 0, 1, 1], [], []>} : vector<2x32xf32>, vector<32x32xf32>, vector<2x32xf32> -> vector<2x32xf32>
    %99 = arith.addf %97, %98 : vector<2x32xf32>
    %100 = arith.addf %99, %5 : vector<2x32xf32>
    %101 = math.tanh %100 : vector<2x32xf32>
    %c0_39 = arith.constant 0 : index
    %c0_40 = arith.constant 0 : index
    %c0_41 = arith.constant 0 : index
    %102 = vector.load %arg11[%c0_39, %c0_40, %c0_41] : memref<2x2x32xf32, #tpu.memory_space<vmem>>, vector<1x2x32xf32>
    %103 = vector.shape_cast %102 : vector<1x2x32xf32> to vector<2x32xf32>
    %104 = vector.shape_cast %96 : vector<2x32xf32> to vector<1x2x32xf32>
    tpu.vector_store %arg11[%c0_39, %c0_40, %c0_41], %104 {strides = array<i32>} : memref<2x2x32xf32, #tpu.memory_space<vmem>>, vector<1x2x32xf32>,
    %c1 = arith.constant 1 : index
    %c0_42 = arith.constant 0 : index
    %c0_43 = arith.constant 0 : index
    %105 = vector.load %arg11[%c1, %c0_42, %c0_43] : memref<2x2x32xf32, #tpu.memory_space<vmem>>, vector<1x2x32xf32>
    %106 = vector.shape_cast %105 : vector<1x2x32xf32> to vector<2x32xf32>
    %107 = vector.shape_cast %101 : vector<2x32xf32> to vector<1x2x32xf32>
    tpu.vector_store %arg11[%c1, %c0_42, %c0_43], %107 {strides = array<i32>} : memref<2x2x32xf32, #tpu.memory_space<vmem>>, vector<1x2x32xf32>,
    %108 = vector.extract_strided_slice %24 {offsets = [0, 0], sizes = [1, 32], strides = [1, 1]} : vector<2x32xf32> to vector<1x32xf32>
    %109 = vector.extract_strided_slice %35 {offsets = [0, 0], sizes = [1, 32], strides = [1, 1]} : vector<2x32xf32> to vector<1x32xf32>
    %110 = vector.extract_strided_slice %46 {offsets = [0, 0], sizes = [1, 32], strides = [1, 1]} : vector<2x32xf32> to vector<1x32xf32>
    %111 = vector.extract_strided_slice %57 {offsets = [0, 0], sizes = [1, 32], strides = [1, 1]} : vector<2x32xf32> to vector<1x32xf32>
    %112 = vector.extract_strided_slice %68 {offsets = [0, 0], sizes = [1, 32], strides = [1, 1]} : vector<2x32xf32> to vector<1x32xf32>
    %113 = vector.extract_strided_slice %79 {offsets = [0, 0], sizes = [1, 32], strides = [1, 1]} : vector<2x32xf32> to vector<1x32xf32>
    %114 = vector.extract_strided_slice %90 {offsets = [0, 0], sizes = [1, 32], strides = [1, 1]} : vector<2x32xf32> to vector<1x32xf32>
    %115 = vector.extract_strided_slice %101 {offsets = [0, 0], sizes = [1, 32], strides = [1, 1]} : vector<2x32xf32> to vector<1x32xf32>
    %116 = vector.extract_strided_slice %24 {offsets = [1, 0], sizes = [1, 32], strides = [1, 1]} : vector<2x32xf32> to vector<1x32xf32>
    %117 = vector.extract_strided_slice %35 {offsets = [1, 0], sizes = [1, 32], strides = [1, 1]} : vector<2x32xf32> to vector<1x32xf32>
    %118 = vector.extract_strided_slice %46 {offsets = [1, 0], sizes = [1, 32], strides = [1, 1]} : vector<2x32xf32> to vector<1x32xf32>
    %119 = vector.extract_strided_slice %57 {offsets = [1, 0], sizes = [1, 32], strides = [1, 1]} : vector<2x32xf32> to vector<1x32xf32>
    %120 = vector.extract_strided_slice %68 {offsets = [1, 0], sizes = [1, 32], strides = [1, 1]} : vector<2x32xf32> to vector<1x32xf32>
    %121 = vector.extract_strided_slice %79 {offsets = [1, 0], sizes = [1, 32], strides = [1, 1]} : vector<2x32xf32> to vector<1x32xf32>
    %122 = vector.extract_strided_slice %90 {offsets = [1, 0], sizes = [1, 32], strides = [1, 1]} : vector<2x32xf32> to vector<1x32xf32>
    %123 = vector.extract_strided_slice %101 {offsets = [1, 0], sizes = [1, 32], strides = [1, 1]} : vector<2x32xf32> to vector<1x32xf32>
    %124 = tpu.concatenate %108, %109, %110, %111, %112, %113, %114, %115, %116, %117, %118, %119, %120, %121, %122, %123 in 0 : vector<1x32xf32>, vector<1x32xf32>, vector<1x32xf32>, vector<1x32xf32>, vector<1x32xf32>, vector<1x32xf32>, vector<1x32xf32>, vector<1x32xf32>, vector<1x32xf32>, vector<1x32xf32>, vector<1x32xf32>, vector<1x32xf32>, vector<1x32xf32>, vector<1x32xf32>, vector<1x32xf32>, vector<1x32xf32> -> vector<16x32xf32>
    %c0_44 = arith.constant 0 : index
    %c0_45 = arith.constant 0 : index
    %125 = vector.load %arg8[%c0_44, %c0_45] : memref<32x4xf32, #tpu.memory_space<vmem>>, vector<32x4xf32>
    %cst_46 = arith.constant dense<0.000000e+00> : vector<16x4xf32>
    %126 = tpu.matmul %124, %125, %cst_46 {dimension_numbers = #tpu.dot_dimension_numbers<[1], [0], [0], [1], [0, 0, 1, 1], [], []>} : vector<16x32xf32>, vector<32x4xf32>, vector<16x4xf32> -> vector<16x4xf32>
    %c0_47 = arith.constant 0 : index
    %c0_48 = arith.constant 0 : index
    %127 = vector.load %arg9[%c0_47, %c0_48] : memref<1x4xf32, #tpu.memory_space<vmem>>, vector<1x4xf32>
    %128 = vector.broadcast %127 : vector<1x4xf32> to vector<16x4xf32>
    %129 = arith.addf %126, %128 : vector<16x4xf32>
    %c0_49 = arith.constant 0 : index
    %c0_50 = arith.constant 0 : index
    %130 = vector.load %arg10[%c0_49, %c0_50] : memref<16x4xf32, #tpu.memory_space<vmem>>, vector<16x4xf32>
    tpu.vector_store %arg10[%c0_49, %c0_50], %129 {strides = array<i32>} : memref<16x4xf32, #tpu.memory_space<vmem>>, vector<16x4xf32>,
    return
  }
  func.func @transform_0(%arg0: i32) -> (i32, i32) {
    %c0_i32 = arith.constant 0 : i32
    %c0_i32_0 = arith.constant 0 : i32
    %c0_i32_1 = arith.constant 0 : i32
    return %c0_i32, %c0_i32_0 : i32, i32
  }
  func.func @transform_1(%arg0: i32) -> (i32, i32) {
    %c0_i32 = arith.constant 0 : i32
    %c0_i32_0 = arith.constant 0 : i32
    %c0_i32_1 = arith.constant 0 : i32
    return %c0_i32, %c0_i32_0 : i32, i32
  }
  func.func @transform_2(%arg0: i32) -> (i32, i32) {
    %c0_i32 = arith.constant 0 : i32
    %c0_i32_0 = arith.constant 0 : i32
    %c0_i32_1 = arith.constant 0 : i32
    return %c0_i32, %c0_i32_0 : i32, i32
  }
  func.func @transform_3(%arg0: i32) -> (i32, i32) {
    %c0_i32 = arith.constant 0 : i32
    %c0_i32_0 = arith.constant 0 : i32
    %c0_i32_1 = arith.constant 0 : i32
    return %c0_i32, %c0_i32_0 : i32, i32
  }
  func.func @transform_4(%arg0: i32) -> (i32, i32) {
    %c0_i32 = arith.constant 0 : i32
    %c0_i32_0 = arith.constant 0 : i32
    %c0_i32_1 = arith.constant 0 : i32
    return %c0_i32, %c0_i32_0 : i32, i32
  }
  func.func @transform_5(%arg0: i32) -> (i32, i32) {
    %c0_i32 = arith.constant 0 : i32
    %c0_i32_0 = arith.constant 0 : i32
    %c0_i32_1 = arith.constant 0 : i32
    return %c0_i32, %c0_i32_0 : i32, i32
  }
  func.func @transform_6(%arg0: i32) -> (i32, i32) {
    %c0_i32 = arith.constant 0 : i32
    %c0_i32_0 = arith.constant 0 : i32
    %c0_i32_1 = arith.constant 0 : i32
    return %c0_i32, %c0_i32_0 : i32, i32
  }
  func.func @transform_7(%arg0: i32) -> (i32, i32) {
    %c0_i32 = arith.constant 0 : i32
    %c0_i32_0 = arith.constant 0 : i32
    %c0_i32_1 = arith.constant 0 : i32
    return %c0_i32, %c0_i32_0 : i32, i32
  }
  func.func @transform_8(%arg0: i32) -> (i32, i32) {
    %c0_i32 = arith.constant 0 : i32
    %c0_i32_0 = arith.constant 0 : i32
    %c0_i32_1 = arith.constant 0 : i32
    return %c0_i32, %c0_i32_0 : i32, i32
  }
  func.func @transform_9(%arg0: i32) -> (i32, i32) {
    %c0_i32 = arith.constant 0 : i32
    %c0_i32_0 = arith.constant 0 : i32
    %c0_i32_1 = arith.constant 0 : i32
    return %c0_i32, %c0_i32_0 : i32, i32
  }
  func.func @transform_10(%arg0: i32) -> (i32, i32, i32) {
    %c0_i32 = arith.constant 0 : i32
    %c0_i32_0 = arith.constant 0 : i32
    %c0_i32_1 = arith.constant 0 : i32
    %c0_i32_2 = arith.constant 0 : i32
    return %c0_i32, %c0_i32_0, %c0_i32_1 : i32, i32, i32
  }
}

</mosaic_0001>

<llo_original>
// kernel: rnn_model_forward.1
$region0: #{rnn_model_forward.1}
  #allocation0 [shape = 'u32[]', space=smem, size = 0x4, offset = 0x4, fixed_abs, tag = 'smem constant byte address 0x4 - core index']
  #allocation1 [shape = 'u32[144,128]{1,0:T(1,128)}', space=vmem, size = 0x12000, scoped, tag = 'internal scratch']
  %s0 = inlined_call_operand.hbm [shape: f32[16,8], index: 0, kind: input, shape index: {}]
  %s1 = inlined_call_operand.hbm [shape: f32[8,32], index: 1, kind: input, shape index: {}]
  %s2 = inlined_call_operand.vmem [shape: f32[32,32], index: 2, kind: input, shape index: {}]
  %s3 = inlined_call_operand.vmem [shape: f32[1,32], index: 3, kind: input, shape index: {}]
  %s4 = inlined_call_operand.vmem [shape: f32[32,32], index: 4, kind: input, shape index: {}]
  %s5 = inlined_call_operand.hbm [shape: f32[32,32], index: 5, kind: input, shape index: {}]
  %s6 = inlined_call_operand.vmem [shape: f32[1,32], index: 6, kind: input, shape index: {}]
  %s7 = inlined_call_operand.vmem [shape: f32[32,4], index: 7, kind: input, shape index: {}]
  %s8 = inlined_call_operand.hbm [shape: f32[1,4], index: 8, kind: input, shape index: {}]
  %s9 = inlined_call_operand.vmem [shape: f32[16,4], index: 9, kind: output, shape index: {0}]
  %s10 = inlined_call_operand.hbm [shape: f32[2,2,32], index: 10, kind: output, shape index: {1}]
  %11 = xla_tuple %s9, %s10
  %s12 = sld [smem:[#allocation0]]
  $region70: #{rnn_model_forward.1} parent=0
    _
  %s14 = ssub.s32 1, %s12
  %s15 = scalar_select 0, %s14, %s12
  $region1: #{rnn_model_forward.1} parent=0
    #allocation2 [shape = 'u8[8192]{0}', space=vmem, size = 0x2000, scoped, tag = 'input window, operand 0, single buffered']
    #allocation3 [shape = 's32[1]{0}', space=sflag, size = 0x4, scoped, tag = 'scoped memory for rnn_model_forward.1']
    #allocation4 [shape = 's32[1]{0}', space=sflag, size = 0x4, scoped, tag = 'scoped memory for rnn_model_forward.1']
    #allocation5 [shape = 'u8[4096]{0}', space=vmem, size = 0x1000, scoped, tag = 'input window, operand 1, single buffered']
    #allocation6 [shape = 's32[1]{0}', space=sflag, size = 0x4, scoped, tag = 'scoped memory for rnn_model_forward.1']
    #allocation7 [shape = 'u8[16384]{0}', space=vmem, size = 0x4000, scoped, tag = 'input window, operand 5, single buffered']
    #allocation8 [shape = 'u8[512]{0}', space=vmem, size = 0x400, scoped, tag = 'input window, operand 8, single buffered']
    #allocation9 [shape = 's32[1]{0}', space=sflag, size = 0x4, scoped, tag = 'scoped memory for rnn_model_forward.1']
    #allocation10 [shape = 'u8[2048]{0}', space=vmem, size = 0x800, scoped, tag = 'output window, operand 1, single buffered']
    %16 = vsyncpa [#allocation3], 0
    %17 = vsyncpa [#allocation6], 0
    %18 = vsyncpa [#allocation9], 0
    %19 = vsyncpa [#allocation4], 0
    // Predicated region
    $region2: #{rnn_model_forward.1} parent=1 // pred_check
      _
    $region3: #{rnn_model_forward.1} parent=1 // pred_check_branch
      %21 = sbr.rel (0) target = $region5
    $region4: #{rnn_model_forward.1} parent=1 // pred_region
      %s23 = ssub.s32 256, 256
      %24 = vsyncadd [#allocation3], %s23
      %s25 = sshll.u32 [#allocation2], 4
      %s26 = int_to_ptr.vmem [resolvable:$true] %s25
      %31 = dma.hbm_to_vmem [thread:$0]  %s0, 256, %s26, [#allocation3], 128, 128, 8
    $region5: #{rnn_model_forward.1} parent=1 // pred_fallthru
      _
    // Predicated region
    $region6: #{rnn_model_forward.1} parent=1 // pred_check
      _
    $region7: #{rnn_model_forward.1} parent=1 // pred_check_branch
      %33 = sbr.rel (0) target = $region9
    $region8: #{rnn_model_forward.1} parent=1 // pred_region
      %s35 = ssub.s32 128, 128
      %36 = vsyncadd [#allocation6], %s35
      %s38 = sshll.u32 [#allocation5], 4
      %s39 = int_to_ptr.vmem [resolvable:$true] %s38
      %41 = dma.hbm_to_vmem [thread:$0]  %s1, 128, %s39, [#allocation6]
    $region9: #{rnn_model_forward.1} parent=1 // pred_fallthru
      _
    // Predicated region
    $region10: #{rnn_model_forward.1} parent=1 // pred_check
      _
    $region11: #{rnn_model_forward.1} parent=1 // pred_check_branch
      %43 = sbr.rel (0) target = $region13
    $region12: #{rnn_model_forward.1} parent=1 // pred_region
      _
    $region13: #{rnn_model_forward.1} parent=1 // pred_fallthru
      _
    // Predicated region
    $region14: #{rnn_model_forward.1} parent=1 // pred_check
      _
    $region15: #{rnn_model_forward.1} parent=1 // pred_check_branch
      %45 = sbr.rel (0) target = $region17
    $region16: #{rnn_model_forward.1} parent=1 // pred_region
      _
    $region17: #{rnn_model_forward.1} parent=1 // pred_fallthru
      _
    // Predicated region
    $region18: #{rnn_model_forward.1} parent=1 // pred_check
      _
    $region19: #{rnn_model_forward.1} parent=1 // pred_check_branch
      %47 = sbr.rel (0) target = $region21
    $region20: #{rnn_model_forward.1} parent=1 // pred_region
      _
    $region21: #{rnn_model_forward.1} parent=1 // pred_fallthru
      _
    // Predicated region
    $region22: #{rnn_model_forward.1} parent=1 // pred_check
      _
    $region23: #{rnn_model_forward.1} parent=1 // pred_check_branch
      %49 = sbr.rel (0) target = $region25
    $region24: #{rnn_model_forward.1} parent=1 // pred_region
      %s51 = ssub.s32 512, 512
      %52 = vsyncadd [#allocation6], %s51
      %s53 = sshll.u32 [#allocation7], 4
      %s54 = int_to_ptr.vmem [resolvable:$true] %s53
      %59 = dma.hbm_to_vmem [thread:$0]  %s5, 512, %s54, [#allocation6], 128, 128, 8
    $region25: #{rnn_model_forward.1} parent=1 // pred_fallthru
      _
    // Predicated region
    $region26: #{rnn_model_forward.1} parent=1 // pred_check
      _
    $region27: #{rnn_model_forward.1} parent=1 // pred_check_branch
      %61 = sbr.rel (0) target = $region29
    $region28: #{rnn_model_forward.1} parent=1 // pred_region
      _
    $region29: #{rnn_model_forward.1} parent=1 // pred_fallthru
      _
    // Predicated region
    $region30: #{rnn_model_forward.1} parent=1 // pred_check
      _
    $region31: #{rnn_model_forward.1} parent=1 // pred_check_branch
      %63 = sbr.rel (0) target = $region33
    $region32: #{rnn_model_forward.1} parent=1 // pred_region
      _
    $region33: #{rnn_model_forward.1} parent=1 // pred_fallthru
      _
    // Predicated region
    $region34: #{rnn_model_forward.1} parent=1 // pred_check
      _
    $region35: #{rnn_model_forward.1} parent=1 // pred_check_branch
      %65 = sbr.rel (0) target = $region37
    $region36: #{rnn_model_forward.1} parent=1 // pred_region
      %s67 = ssub.s32 16, 16
      %68 = vsyncadd [#allocation9], %s67
      %s70 = sshll.u32 [#allocation8], 4
      %s71 = int_to_ptr.vmem [resolvable:$true] %s70
      %73 = dma.hbm_to_vmem [thread:$0]  %s8, 16, %s71, [#allocation9]
    $region37: #{rnn_model_forward.1} parent=1 // pred_fallthru
      _
    // Predicated region
    $region38: #{rnn_model_forward.1} parent=1 // pred_check
      _
    $region39: #{rnn_model_forward.1} parent=1 // pred_check_branch
      %75 = sbr.rel (0) target = $region41
    $region40: #{rnn_model_forward.1} parent=1 // pred_region
      %76 = dma.done [#allocation3], 256
    $region41: #{rnn_model_forward.1} parent=1 // pred_fallthru
      _
    // Predicated region
    $region42: #{rnn_model_forward.1} parent=1 // pred_check
      _
    $region43: #{rnn_model_forward.1} parent=1 // pred_check_branch
      %78 = sbr.rel (0) target = $region45
    $region44: #{rnn_model_forward.1} parent=1 // pred_region
      %79 = dma.done [#allocation6], 128
    $region45: #{rnn_model_forward.1} parent=1 // pred_fallthru
      _
    // Predicated region
    $region46: #{rnn_model_forward.1} parent=1 // pred_check
      _
    $region47: #{rnn_model_forward.1} parent=1 // pred_check_branch
      %81 = sbr.rel (0) target = $region49
    $region48: #{rnn_model_forward.1} parent=1 // pred_region
      %82 = dma.done [#allocation6], 512
    $region49: #{rnn_model_forward.1} parent=1 // pred_fallthru
      _
    // Predicated region
    $region50: #{rnn_model_forward.1} parent=1 // pred_check
      _
    $region51: #{rnn_model_forward.1} parent=1 // pred_check_branch
      %84 = sbr.rel (0) target = $region53
    $region52: #{rnn_model_forward.1} parent=1 // pred_region
      %85 = dma.done [#allocation9], 16
    $region53: #{rnn_model_forward.1} parent=1 // pred_fallthru
      _
    %v86 = vld [vmem:[%s2] sm:$0xff]
    %v87 = vld [vmem:[%s2 + $0x8] sm:$0xff]
    %v88 = vld [vmem:[%s2 + $0x10] sm:$0xff]
    %v89 = vld [vmem:[%s2 + $0x18] sm:$0xff]
    %v90 = vld [vmem:[%s4] sm:$0xff]
    %v91 = vld [vmem:[%s4 + $0x8] sm:$0xff]
    %v92 = vld [vmem:[%s4 + $0x10] sm:$0xff]
    %v93 = vld [vmem:[%s4 + $0x18] sm:$0xff]
    %v94 = vld [vmem:[#allocation7] sm:$0xff]
    %v95 = vld [vmem:[#allocation7 + $0x8] sm:$0xff]
    %v96 = vld [vmem:[#allocation7 + $0x10] sm:$0xff]
    %v97 = vld [vmem:[#allocation7 + $0x18] sm:$0xff]
    %v98 = vld [vmem:[%s6] sm:$0x1]
    %v100 = vlaneseq
    %v101 = vshrl.u32 %v100, 7
    %v102 = vsub.s32 0, %v101
    %v103 = vrot.slane %v98, %v102
    %v105 = vld [vmem:[#allocation2] sm:$0xff]
    %v106 = vld [vmem:[#allocation2 + $0x8] sm:$0xff]
    %v107 = vld [vmem:[#allocation5] sm:$0xff]
    %v108 = vld [vmem:[%s3] sm:$0x1]
    %v110 = vlaneseq
    %v111 = vshrl.u32 %v110, 7
    %v112 = vsub.s32 0, %v111
    %v113 = vrot.slane %v108, %v112
    %vm115 = vcmask 64512
    %v117 = vsel %vm115, %v105, 0
    %v120 = vsel %vm115, %v106, 0
    %122 = vmatprep.subr.mxu0 0.0
    %123 = vmatpush1.msra.mxu0 %v107
    %124 = vmatprep.subr.mxu0 0.0
    %125 = vmatpush1.msra.mxu0 0.0
    %126 = vmatprep.subr.mxu0 0.0
    %127 = vmatpush1.msra.mxu0 0.0
    %128 = vmatprep.subr.mxu0 0.0
    %129 = vmatpush1.msra.mxu0 0.0
    %130 = vmatprep.subr.mxu0 0.0
    %131 = vmatpush1.msra.mxu0 0.0
    %132 = vmatprep.subr.mxu0 0.0
    %133 = vmatpush1.msra.mxu0 0.0
    %134 = vmatprep.subr.mxu0 0.0
    %135 = vmatpush1.msra.mxu0 0.0
    %136 = vmatprep.subr.mxu0 0.0
    %137 = vmatpush1.msra.mxu0 0.0
    %138 = vmatprep.subr.mxu0 0.0
    %139 = vmatpush1.msra.mxu0 0.0
    %140 = vmatprep.subr.mxu0 0.0
    %141 = vmatpush1.msra.mxu0 0.0
    %142 = vmatprep.subr.mxu0 0.0
    %143 = vmatpush1.msra.mxu0 0.0
    %144 = vmatprep.subr.mxu0 0.0
    %145 = vmatpush1.msra.mxu0 0.0
    %146 = vmatprep.subr.mxu0 0.0
    %147 = vmatpush1.msra.mxu0 0.0
    %148 = vmatprep.subr.mxu0 0.0
    %149 = vmatpush1.msra.mxu0 0.0
    %150 = vmatprep.subr.mxu0 0.0
    %151 = vmatpush1.msra.mxu0 0.0
    %152 = vmatprep.subr.mxu0 0.0
    %153 = vmatpush1.msra.mxu0 0.0
    %154 = vmatprep.subr.mxu0 0.0
    %155 = vmatpush1.msra.mxu0 0.0
    %156 = vmatprep.subr.mxu0 0.0
    %157 = vmatpush1.msra.mxu0 0.0
    %158 = vmatprep.subr.mxu0 0.0
    %159 = vmatpush1.msra.mxu0 0.0
    %160 = vmatprep.subr.mxu0 0.0
    %161 = vmatpush1.msra.mxu0 0.0
    %162 = vmatprep.subr.mxu0 0.0
    %163 = vmatpush1.msra.mxu0 0.0
    %164 = vmatprep.subr.mxu0 0.0
    %165 = vmatpush1.msra.mxu0 0.0
    %166 = vmatprep.subr.mxu0 0.0
    %167 = vmatpush1.msra.mxu0 0.0
    %168 = vmatprep.subr.mxu0 0.0
    %169 = vmatpush1.msra.mxu0 0.0
    %170 = vmatprep.subr.mxu0 0.0
    %171 = vmatpush1.msra.mxu0 0.0
    %172 = vmatprep.subr.mxu0 0.0
    %173 = vmatpush1.msra.mxu0 0.0
    %174 = vmatprep.subr.mxu0 0.0
    %175 = vmatpush1.msra.mxu0 0.0
    %176 = vmatprep.subr.mxu0 0.0
    %177 = vmatpush1.msra.mxu0 0.0
    %178 = vmatprep.subr.mxu0 0.0
    %179 = vmatpush1.msra.mxu0 0.0
    %180 = vmatprep.subr.mxu0 0.0
    %181 = vmatpush1.msra.mxu0 0.0
    %182 = vmatprep.subr.mxu0 0.0
    %183 = vmatpush1.msra.mxu0 0.0
    %184 = vmatprep.subr.mxu0 0.0
    %185 = vmatpush1.msra.mxu0 0.0
    %186 = vmatprep.mubr.f32.mxu0 0.0
    %187 = vmatmul.mubr.f32.gmra.mrb[0].mxu0 %v117
    %v188 = vpop.f32.mrb[0].mxu0
    %v189 = vadd.f32 %v113, %v188
    %v190 = vpop.f32.mrb[0].mxu0
    %191 = vmatprep.mubr.f32.mxu0 0.0
    %192 = vmatmul.mubr.f32.gmra.mrb[0].mxu0 %v120
    %v193 = vpop.f32.mrb[0].mxu0
    %v194 = vadd.f32 %v113, %v193
    %v195 = vpop.f32.mrb[0].mxu0
    %196 = vdwg.mxu0
    %v198 = vrot.slane %v194, 7
    %vm200 = vcmask 1040384
    %v201 = vsel %vm200, %v189, %v198
    %vm202 = vcmask 261120
    %v204 = vsel %vm202, 0.0, 0
    %206 = vmatprep.subr.mxu0 0.0
    %207 = vmatpush1.msra.mxu0 %v86
    %208 = vmatprep.subr.mxu0 0.0
    %209 = vmatpush1.msra.mxu0 %v87
    %210 = vmatprep.subr.mxu0 0.0
    %211 = vmatpush1.msra.mxu0 %v88
    %212 = vmatprep.subr.mxu0 0.0
    %213 = vmatpush1.msra.mxu0 %v89
    %214 = vmatprep.subr.mxu0 0.0
    %215 = vmatpush1.msra.mxu0 0.0
    %216 = vmatprep.subr.mxu0 0.0
    %217 = vmatpush1.msra.mxu0 0.0
    %218 = vmatprep.subr.mxu0 0.0
    %219 = vmatpush1.msra.mxu0 0.0
    %220 = vmatprep.subr.mxu0 0.0
    %221 = vmatpush1.msra.mxu0 0.0
    %222 = vmatprep.subr.mxu0 0.0
    %223 = vmatpush1.msra.mxu0 0.0
    %224 = vmatprep.subr.mxu0 0.0
    %225 = vmatpush1.msra.mxu0 0.0
    %226 = vmatprep.subr.mxu0 0.0
    %227 = vmatpush1.msra.mxu0 0.0
    %228 = vmatprep.subr.mxu0 0.0
    %229 = vmatpush1.msra.mxu0 0.0
    %230 = vmatprep.subr.mxu0 0.0
    %231 = vmatpush1.msra.mxu0 0.0
    %232 = vmatprep.subr.mxu0 0.0
    %233 = vmatpush1.msra.mxu0 0.0
    %234 = vmatprep.subr.mxu0 0.0
    %235 = vmatpush1.msra.mxu0 0.0
    %236 = vmatprep.subr.mxu0 0.0
    %237 = vmatpush1.msra.mxu0 0.0
    %238 = vmatprep.subr.mxu0 0.0
    %239 = vmatpush1.msra.mxu0 0.0
    %240 = vmatprep.subr.mxu0 0.0
    %241 = vmatpush1.msra.mxu0 0.0
    %242 = vmatprep.subr.mxu0 0.0
    %243 = vmatpush1.msra.mxu0 0.0
    %244 = vmatprep.subr.mxu0 0.0
    %245 = vmatpush1.msra.mxu0 0.0
    %246 = vmatprep.subr.mxu0 0.0
    %247 = vmatpush1.msra.mxu0 0.0
    %248 = vmatprep.subr.mxu0 0.0
    %249 = vmatpush1.msra.mxu0 0.0
    %250 = vmatprep.subr.mxu0 0.0
    %251 = vmatpush1.msra.mxu0 0.0
    %252 = vmatprep.subr.mxu0 0.0
    %253 = vmatpush1.msra.mxu0 0.0
    %254 = vmatprep.subr.mxu0 0.0
    %255 = vmatpush1.msra.mxu0 0.0
    %256 = vmatprep.subr.mxu0 0.0
    %257 = vmatpush1.msra.mxu0 0.0
    %258 = vmatprep.subr.mxu0 0.0
    %259 = vmatpush1.msra.mxu0 0.0
    %260 = vmatprep.subr.mxu0 0.0
    %261 = vmatpush1.msra.mxu0 0.0
    %262 = vmatprep.subr.mxu0 0.0
    %263 = vmatpush1.msra.mxu0 0.0
    %264 = vmatprep.subr.mxu0 0.0
    %265 = vmatpush1.msra.mxu0 0.0
    %266 = vmatprep.subr.mxu0 0.0
    %267 = vmatpush1.msra.mxu0 0.0
    %268 = vmatprep.subr.mxu0 0.0
    %269 = vmatpush1.msra.mxu0 0.0
    %270 = vmatprep.mubr.f32.mxu0 0.0
    %271 = vmatmul.mubr.f32.gmra.mrb[0].mxu0 %v204
    %v272 = vpop.f32.mrb[0].mxu0
    %v273 = vadd.f32 0.0, %v272
    %v274 = vpop.f32.mrb[0].mxu0
    %275 = vdwg.mxu0
    %v276 = vadd.f32 %v201, %v273
    %v277 = vtanh.pop %v276
    %278 = vmatprep.subr.mxu0 0.0
    %279 = vmatpush1.msra.mxu0 %v94
    %280 = vmatprep.subr.mxu0 0.0
    %281 = vmatpush1.msra.mxu0 %v95
    %282 = vmatprep.subr.mxu0 0.0
    %283 = vmatpush1.msra.mxu0 %v96
    %284 = vmatprep.subr.mxu0 0.0
    %285 = vmatpush1.msra.mxu0 %v97
    %286 = vmatprep.subr.mxu0 0.0
    %287 = vmatpush1.msra.mxu0 0.0
    %288 = vmatprep.subr.mxu0 0.0
    %289 = vmatpush1.msra.mxu0 0.0
    %290 = vmatprep.subr.mxu0 0.0
    %291 = vmatpush1.msra.mxu0 0.0
    %292 = vmatprep.subr.mxu0 0.0
    %293 = vmatpush1.msra.mxu0 0.0
    %294 = vmatprep.subr.mxu0 0.0
    %295 = vmatpush1.msra.mxu0 0.0
    %296 = vmatprep.subr.mxu0 0.0
    %297 = vmatpush1.msra.mxu0 0.0
    %298 = vmatprep.subr.mxu0 0.0
    %299 = vmatpush1.msra.mxu0 0.0
    %300 = vmatprep.subr.mxu0 0.0
    %301 = vmatpush1.msra.mxu0 0.0
    %302 = vmatprep.subr.mxu0 0.0
    %303 = vmatpush1.msra.mxu0 0.0
    %304 = vmatprep.subr.mxu0 0.0
    %305 = vmatpush1.msra.mxu0 0.0
    %306 = vmatprep.subr.mxu0 0.0
    %307 = vmatpush1.msra.mxu0 0.0
    %308 = vmatprep.subr.mxu0 0.0
    %309 = vmatpush1.msra.mxu0 0.0
    %310 = vmatprep.subr.mxu0 0.0
    %311 = vmatpush1.msra.mxu0 0.0
    %312 = vmatprep.subr.mxu0 0.0
    %313 = vmatpush1.msra.mxu0 0.0
    %314 = vmatprep.subr.mxu0 0.0
    %315 = vmatpush1.msra.mxu0 0.0
    %316 = vmatprep.subr.mxu0 0.0
    %317 = vmatpush1.msra.mxu0 0.0
    %318 = vmatprep.subr.mxu0 0.0
    %319 = vmatpush1.msra.mxu0 0.0
    %320 = vmatprep.subr.mxu0 0.0
    %321 = vmatpush1.msra.mxu0 0.0
    %322 = vmatprep.subr.mxu0 0.0
    %323 = vmatpush1.msra.mxu0 0.0
    %324 = vmatprep.subr.mxu0 0.0
    %325 = vmatpush1.msra.mxu0 0.0
    %326 = vmatprep.subr.mxu0 0.0
    %327 = vmatpush1.msra.mxu0 0.0
    %328 = vmatprep.subr.mxu0 0.0
    %329 = vmatpush1.msra.mxu0 0.0
    %330 = vmatprep.subr.mxu0 0.0
    %331 = vmatpush1.msra.mxu0 0.0
    %332 = vmatprep.subr.mxu0 0.0
    %333 = vmatpush1.msra.mxu0 0.0
    %334 = vmatprep.subr.mxu0 0.0
    %335 = vmatpush1.msra.mxu0 0.0
    %336 = vmatprep.subr.mxu0 0.0
    %337 = vmatpush1.msra.mxu0 0.0
    %338 = vmatprep.subr.mxu0 0.0
    %339 = vmatpush1.msra.mxu0 0.0
    %340 = vmatprep.subr.mxu0 0.0
    %341 = vmatpush1.msra.mxu0 0.0
    %342 = vmatprep.mubr.f32.mxu0 0.0
    %343 = vmatmul.mubr.f32.gmra.mrb[0].mxu0 %v204
    %v344 = vpop.f32.mrb[0].mxu0
    %v345 = vadd.f32 0.0, %v344
    %v346 = vpop.f32.mrb[0].mxu0
    %347 = vdwg.mxu0
    %v349 = vsel %vm202, %v277, 0
    %351 = vmatprep.subr.mxu0 0.0
    %352 = vmatpush1.msra.mxu0 %v90
    %353 = vmatprep.subr.mxu0 0.0
    %354 = vmatpush1.msra.mxu0 %v91
    %355 = vmatprep.subr.mxu0 0.0
    %356 = vmatpush1.msra.mxu0 %v92
    %357 = vmatprep.subr.mxu0 0.0
    %358 = vmatpush1.msra.mxu0 %v93
    %359 = vmatprep.subr.mxu0 0.0
    %360 = vmatpush1.msra.mxu0 0.0
    %361 = vmatprep.subr.mxu0 0.0
    %362 = vmatpush1.msra.mxu0 0.0
    %363 = vmatprep.subr.mxu0 0.0
    %364 = vmatpush1.msra.mxu0 0.0
    %365 = vmatprep.subr.mxu0 0.0
    %366 = vmatpush1.msra.mxu0 0.0
    %367 = vmatprep.subr.mxu0 0.0
    %368 = vmatpush1.msra.mxu0 0.0
    %369 = vmatprep.subr.mxu0 0.0
    %370 = vmatpush1.msra.mxu0 0.0
    %371 = vmatprep.subr.mxu0 0.0
    %372 = vmatpush1.msra.mxu0 0.0
    %373 = vmatprep.subr.mxu0 0.0
    %374 = vmatpush1.msra.mxu0 0.0
    %375 = vmatprep.subr.mxu0 0.0
    %376 = vmatpush1.msra.mxu0 0.0
    %377 = vmatprep.subr.mxu0 0.0
    %378 = vmatpush1.msra.mxu0 0.0
    %379 = vmatprep.subr.mxu0 0.0
    %380 = vmatpush1.msra.mxu0 0.0
    %381 = vmatprep.subr.mxu0 0.0
    %382 = vmatpush1.msra.mxu0 0.0
    %383 = vmatprep.subr.mxu0 0.0
    %384 = vmatpush1.msra.mxu0 0.0
    %385 = vmatprep.subr.mxu0 0.0
    %386 = vmatpush1.msra.mxu0 0.0
    %387 = vmatprep.subr.mxu0 0.0
    %388 = vmatpush1.msra.mxu0 0.0
    %389 = vmatprep.subr.mxu0 0.0
    %390 = vmatpush1.msra.mxu0 0.0
    %391 = vmatprep.subr.mxu0 0.0
    %392 = vmatpush1.msra.mxu0 0.0
    %393 = vmatprep.subr.mxu0 0.0
    %394 = vmatpush1.msra.mxu0 0.0
    %395 = vmatprep.subr.mxu0 0.0
    %396 = vmatpush1.msra.mxu0 0.0
    %397 = vmatprep.subr.mxu0 0.0
    %398 = vmatpush1.msra.mxu0 0.0
    %399 = vmatprep.subr.mxu0 0.0
    %400 = vmatpush1.msra.mxu0 0.0
    %401 = vmatprep.subr.mxu0 0.0
    %402 = vmatpush1.msra.mxu0 0.0
    %403 = vmatprep.subr.mxu0 0.0
    %404 = vmatpush1.msra.mxu0 0.0
    %405 = vmatprep.subr.mxu0 0.0
    %406 = vmatpush1.msra.mxu0 0.0
    %407 = vmatprep.subr.mxu0 0.0
    %408 = vmatpush1.msra.mxu0 0.0
    %409 = vmatprep.subr.mxu0 0.0
    %410 = vmatpush1.msra.mxu0 0.0
    %411 = vmatprep.subr.mxu0 0.0
    %412 = vmatpush1.msra.mxu0 0.0
    %413 = vmatprep.subr.mxu0 0.0
    %414 = vmatpush1.msra.mxu0 0.0
    %415 = vmatprep.mubr.f32.mxu0 0.0
    %416 = vmatmul.mubr.f32.gmra.mrb[0].mxu0 %v349
    %v417 = vpop.f32.mrb[0].mxu0
    %v418 = vadd.f32 %v345, %v417
    %v419 = vpop.f32.mrb[0].mxu0
    %420 = vdwg.mxu0
    %v421 = vadd.f32 %v418, %v103
    %v422 = vtanh.pop %v421
    %v424 = vrot.slane %v189, 1
    %v426 = vsel %vm200, %v424, %v194
    %427 = vmatprep.subr.mxu0 0.0
    %428 = vmatpush1.msra.mxu0 %v86
    %429 = vmatprep.subr.mxu0 0.0
    %430 = vmatpush1.msra.mxu0 %v87
    %431 = vmatprep.subr.mxu0 0.0
    %432 = vmatpush1.msra.mxu0 %v88
    %433 = vmatprep.subr.mxu0 0.0
    %434 = vmatpush1.msra.mxu0 %v89
    %435 = vmatprep.subr.mxu0 0.0
    %436 = vmatpush1.msra.mxu0 0.0
    %437 = vmatprep.subr.mxu0 0.0
    %438 = vmatpush1.msra.mxu0 0.0
    %439 = vmatprep.subr.mxu0 0.0
    %440 = vmatpush1.msra.mxu0 0.0
    %441 = vmatprep.subr.mxu0 0.0
    %442 = vmatpush1.msra.mxu0 0.0
    %443 = vmatprep.subr.mxu0 0.0
    %444 = vmatpush1.msra.mxu0 0.0
    %445 = vmatprep.subr.mxu0 0.0
    %446 = vmatpush1.msra.mxu0 0.0
    %447 = vmatprep.subr.mxu0 0.0
    %448 = vmatpush1.msra.mxu0 0.0
    %449 = vmatprep.subr.mxu0 0.0
    %450 = vmatpush1.msra.mxu0 0.0
    %451 = vmatprep.subr.mxu0 0.0
    %452 = vmatpush1.msra.mxu0 0.0
    %453 = vmatprep.subr.mxu0 0.0
    %454 = vmatpush1.msra.mxu0 0.0
    %455 = vmatprep.subr.mxu0 0.0
    %456 = vmatpush1.msra.mxu0 0.0
    %457 = vmatprep.subr.mxu0 0.0
    %458 = vmatpush1.msra.mxu0 0.0
    %459 = vmatprep.subr.mxu0 0.0
    %460 = vmatpush1.msra.mxu0 0.0
    %461 = vmatprep.subr.mxu0 0.0
    %462 = vmatpush1.msra.mxu0 0.0
    %463 = vmatprep.subr.mxu0 0.0
    %464 = vmatpush1.msra.mxu0 0.0
    %465 = vmatprep.subr.mxu0 0.0
    %466 = vmatpush1.msra.mxu0 0.0
    %467 = vmatprep.subr.mxu0 0.0
    %468 = vmatpush1.msra.mxu0 0.0
    %469 = vmatprep.subr.mxu0 0.0
    %470 = vmatpush1.msra.mxu0 0.0
    %471 = vmatprep.subr.mxu0 0.0
    %472 = vmatpush1.msra.mxu0 0.0
    %473 = vmatprep.subr.mxu0 0.0
    %474 = vmatpush1.msra.mxu0 0.0
    %475 = vmatprep.subr.mxu0 0.0
    %476 = vmatpush1.msra.mxu0 0.0
    %477 = vmatprep.subr.mxu0 0.0
    %478 = vmatpush1.msra.mxu0 0.0
    %479 = vmatprep.subr.mxu0 0.0
    %480 = vmatpush1.msra.mxu0 0.0
    %481 = vmatprep.subr.mxu0 0.0
    %482 = vmatpush1.msra.mxu0 0.0
    %483 = vmatprep.subr.mxu0 0.0
    %484 = vmatpush1.msra.mxu0 0.0
    %485 = vmatprep.subr.mxu0 0.0
    %486 = vmatpush1.msra.mxu0 0.0
    %487 = vmatprep.subr.mxu0 0.0
    %488 = vmatpush1.msra.mxu0 0.0
    %489 = vmatprep.subr.mxu0 0.0
    %490 = vmatpush1.msra.mxu0 0.0
    %491 = vmatprep.mubr.f32.mxu0 0.0
    %492 = vmatmul.mubr.f32.gmra.mrb[0].mxu0 %v349
    %v493 = vpop.f32.mrb[0].mxu0
    %v494 = vadd.f32 0.0, %v493
    %v495 = vpop.f32.mrb[0].mxu0
    %496 = vdwg.mxu0
    %v497 = vadd.f32 %v426, %v494
    %v498 = vtanh.pop %v497
    %v500 = vsel %vm202, %v422, 0
    %502 = vmatprep.subr.mxu0 0.0
    %503 = vmatpush1.msra.mxu0 %v94
    %504 = vmatprep.subr.mxu0 0.0
    %505 = vmatpush1.msra.mxu0 %v95
    %506 = vmatprep.subr.mxu0 0.0
    %507 = vmatpush1.msra.mxu0 %v96
    %508 = vmatprep.subr.mxu0 0.0
    %509 = vmatpush1.msra.mxu0 %v97
    %510 = vmatprep.subr.mxu0 0.0
    %511 = vmatpush1.msra.mxu0 0.0
    %512 = vmatprep.subr.mxu0 0.0
    %513 = vmatpush1.msra.mxu0 0.0
    %514 = vmatprep.subr.mxu0 0.0
    %515 = vmatpush1.msra.mxu0 0.0
    %516 = vmatprep.subr.mxu0 0.0
    %517 = vmatpush1.msra.mxu0 0.0
    %518 = vmatprep.subr.mxu0 0.0
    %519 = vmatpush1.msra.mxu0 0.0
    %520 = vmatprep.subr.mxu0 0.0
    %521 = vmatpush1.msra.mxu0 0.0
    %522 = vmatprep.subr.mxu0 0.0
    %523 = vmatpush1.msra.mxu0 0.0
    %524 = vmatprep.subr.mxu0 0.0
    %525 = vmatpush1.msra.mxu0 0.0
    %526 = vmatprep.subr.mxu0 0.0
    %527 = vmatpush1.msra.mxu0 0.0
    %528 = vmatprep.subr.mxu0 0.0
    %529 = vmatpush1.msra.mxu0 0.0
    %530 = vmatprep.subr.mxu0 0.0
    %531 = vmatpush1.msra.mxu0 0.0
    %532 = vmatprep.subr.mxu0 0.0
    %533 = vmatpush1.msra.mxu0 0.0
    %534 = vmatprep.subr.mxu0 0.0
    %535 = vmatpush1.msra.mxu0 0.0
    %536 = vmatprep.subr.mxu0 0.0
    %537 = vmatpush1.msra.mxu0 0.0
    %538 = vmatprep.subr.mxu0 0.0
    %539 = vmatpush1.msra.mxu0 0.0
    %540 = vmatprep.subr.mxu0 0.0
    %541 = vmatpush1.msra.mxu0 0.0
    %542 = vmatprep.subr.mxu0 0.0
    %543 = vmatpush1.msra.mxu0 0.0
    %544 = vmatprep.subr.mxu0 0.0
    %545 = vmatpush1.msra.mxu0 0.0
    %546 = vmatprep.subr.mxu0 0.0
    %547 = vmatpush1.msra.mxu0 0.0
    %548 = vmatprep.subr.mxu0 0.0
    %549 = vmatpush1.msra.mxu0 0.0
    %550 = vmatprep.subr.mxu0 0.0
    %551 = vmatpush1.msra.mxu0 0.0
    %552 = vmatprep.subr.mxu0 0.0
    %553 = vmatpush1.msra.mxu0 0.0
    %554 = vmatprep.subr.mxu0 0.0
    %555 = vmatpush1.msra.mxu0 0.0
    %556 = vmatprep.subr.mxu0 0.0
    %557 = vmatpush1.msra.mxu0 0.0
    %558 = vmatprep.subr.mxu0 0.0
    %559 = vmatpush1.msra.mxu0 0.0
    %560 = vmatprep.subr.mxu0 0.0
    %561 = vmatpush1.msra.mxu0 0.0
    %562 = vmatprep.subr.mxu0 0.0
    %563 = vmatpush1.msra.mxu0 0.0
    %564 = vmatprep.subr.mxu0 0.0
    %565 = vmatpush1.msra.mxu0 0.0
    %566 = vmatprep.mubr.f32.mxu0 0.0
    %567 = vmatmul.mubr.f32.gmra.mrb[0].mxu0 %v500
    %v568 = vpop.f32.mrb[0].mxu0
    %v569 = vadd.f32 0.0, %v568
    %v570 = vpop.f32.mrb[0].mxu0
    %571 = vdwg.mxu0
    %v573 = vsel %vm202, %v498, 0
    %575 = vmatprep.subr.mxu0 0.0
    %576 = vmatpush1.msra.mxu0 %v90
    %577 = vmatprep.subr.mxu0 0.0
    %578 = vmatpush1.msra.mxu0 %v91
    %579 = vmatprep.subr.mxu0 0.0
    %580 = vmatpush1.msra.mxu0 %v92
    %581 = vmatprep.subr.mxu0 0.0
    %582 = vmatpush1.msra.mxu0 %v93
    %583 = vmatprep.subr.mxu0 0.0
    %584 = vmatpush1.msra.mxu0 0.0
    %585 = vmatprep.subr.mxu0 0.0
    %586 = vmatpush1.msra.mxu0 0.0
    %587 = vmatprep.subr.mxu0 0.0
    %588 = vmatpush1.msra.mxu0 0.0
    %589 = vmatprep.subr.mxu0 0.0
    %590 = vmatpush1.msra.mxu0 0.0
    %591 = vmatprep.subr.mxu0 0.0
    %592 = vmatpush1.msra.mxu0 0.0
    %593 = vmatprep.subr.mxu0 0.0
    %594 = vmatpush1.msra.mxu0 0.0
    %595 = vmatprep.subr.mxu0 0.0
    %596 = vmatpush1.msra.mxu0 0.0
    %597 = vmatprep.subr.mxu0 0.0
    %598 = vmatpush1.msra.mxu0 0.0
    %599 = vmatprep.subr.mxu0 0.0
    %600 = vmatpush1.msra.mxu0 0.0
    %601 = vmatprep.subr.mxu0 0.0
    %602 = vmatpush1.msra.mxu0 0.0
    %603 = vmatprep.subr.mxu0 0.0
    %604 = vmatpush1.msra.mxu0 0.0
    %605 = vmatprep.subr.mxu0 0.0
    %606 = vmatpush1.msra.mxu0 0.0
    %607 = vmatprep.subr.mxu0 0.0
    %608 = vmatpush1.msra.mxu0 0.0
    %609 = vmatprep.subr.mxu0 0.0
    %610 = vmatpush1.msra.mxu0 0.0
    %611 = vmatprep.subr.mxu0 0.0
    %612 = vmatpush1.msra.mxu0 0.0
    %613 = vmatprep.subr.mxu0 0.0
    %614 = vmatpush1.msra.mxu0 0.0
    %615 = vmatprep.subr.mxu0 0.0
    %616 = vmatpush1.msra.mxu0 0.0
    %617 = vmatprep.subr.mxu0 0.0
    %618 = vmatpush1.msra.mxu0 0.0
    %619 = vmatprep.subr.mxu0 0.0
    %620 = vmatpush1.msra.mxu0 0.0
    %621 = vmatprep.subr.mxu0 0.0
    %622 = vmatpush1.msra.mxu0 0.0
    %623 = vmatprep.subr.mxu0 0.0
    %624 = vmatpush1.msra.mxu0 0.0
    %625 = vmatprep.subr.mxu0 0.0
    %626 = vmatpush1.msra.mxu0 0.0
    %627 = vmatprep.subr.mxu0 0.0
    %628 = vmatpush1.msra.mxu0 0.0
    %629 = vmatprep.subr.mxu0 0.0
    %630 = vmatpush1.msra.mxu0 0.0
    %631 = vmatprep.subr.mxu0 0.0
    %632 = vmatpush1.msra.mxu0 0.0
    %633 = vmatprep.subr.mxu0 0.0
    %634 = vmatpush1.msra.mxu0 0.0
    %635 = vmatprep.subr.mxu0 0.0
    %636 = vmatpush1.msra.mxu0 0.0
    %637 = vmatprep.subr.mxu0 0.0
    %638 = vmatpush1.msra.mxu0 0.0
    %639 = vmatprep.mubr.f32.mxu0 0.0
    %640 = vmatmul.mubr.f32.gmra.mrb[0].mxu0 %v573
    %v641 = vpop.f32.mrb[0].mxu0
    %v642 = vadd.f32 %v569, %v641
    %v643 = vpop.f32.mrb[0].mxu0
    %644 = vdwg.mxu0
    %v645 = vadd.f32 %v642, %v103
    %v646 = vtanh.pop %v645
    %v647 = vrot.slane %v189, 2
    %v649 = vrot.slane %v194, 1
    %v651 = vsel %vm200, %v647, %v649
    %652 = vmatprep.subr.mxu0 0.0
    %653 = vmatpush1.msra.mxu0 %v86
    %654 = vmatprep.subr.mxu0 0.0
    %655 = vmatpush1.msra.mxu0 %v87
    %656 = vmatprep.subr.mxu0 0.0
    %657 = vmatpush1.msra.mxu0 %v88
    %658 = vmatprep.subr.mxu0 0.0
    %659 = vmatpush1.msra.mxu0 %v89
    %660 = vmatprep.subr.mxu0 0.0
    %661 = vmatpush1.msra.mxu0 0.0
    %662 = vmatprep.subr.mxu0 0.0
    %663 = vmatpush1.msra.mxu0 0.0
    %664 = vmatprep.subr.mxu0 0.0
    %665 = vmatpush1.msra.mxu0 0.0
    %666 = vmatprep.subr.mxu0 0.0
    %667 = vmatpush1.msra.mxu0 0.0
    %668 = vmatprep.subr.mxu0 0.0
    %669 = vmatpush1.msra.mxu0 0.0
    %670 = vmatprep.subr.mxu0 0.0
    %671 = vmatpush1.msra.mxu0 0.0
    %672 = vmatprep.subr.mxu0 0.0
    %673 = vmatpush1.msra.mxu0 0.0
    %674 = vmatprep.subr.mxu0 0.0
    %675 = vmatpush1.msra.mxu0 0.0
    %676 = vmatprep.subr.mxu0 0.0
    %677 = vmatpush1.msra.mxu0 0.0
    %678 = vmatprep.subr.mxu0 0.0
    %679 = vmatpush1.msra.mxu0 0.0
    %680 = vmatprep.subr.mxu0 0.0
    %681 = vmatpush1.msra.mxu0 0.0
    %682 = vmatprep.subr.mxu0 0.0
    %683 = vmatpush1.msra.mxu0 0.0
    %684 = vmatprep.subr.mxu0 0.0
    %685 = vmatpush1.msra.mxu0 0.0
    %686 = vmatprep.subr.mxu0 0.0
    %687 = vmatpush1.msra.mxu0 0.0
    %688 = vmatprep.subr.mxu0 0.0
    %689 = vmatpush1.msra.mxu0 0.0
    %690 = vmatprep.subr.mxu0 0.0
    %691 = vmatpush1.msra.mxu0 0.0
    %692 = vmatprep.subr.mxu0 0.0
    %693 = vmatpush1.msra.mxu0 0.0
    %694 = vmatprep.subr.mxu0 0.0
    %695 = vmatpush1.msra.mxu0 0.0
    %696 = vmatprep.subr.mxu0 0.0
    %697 = vmatpush1.msra.mxu0 0.0
    %698 = vmatprep.subr.mxu0 0.0
    %699 = vmatpush1.msra.mxu0 0.0
    %700 = vmatprep.subr.mxu0 0.0
    %701 = vmatpush1.msra.mxu0 0.0
    %702 = vmatprep.subr.mxu0 0.0
    %703 = vmatpush1.msra.mxu0 0.0
    %704 = vmatprep.subr.mxu0 0.0
    %705 = vmatpush1.msra.mxu0 0.0
    %706 = vmatprep.subr.mxu0 0.0
    %707 = vmatpush1.msra.mxu0 0.0
    %708 = vmatprep.subr.mxu0 0.0
    %709 = vmatpush1.msra.mxu0 0.0
    %710 = vmatprep.subr.mxu0 0.0
    %711 = vmatpush1.msra.mxu0 0.0
    %712 = vmatprep.subr.mxu0 0.0
    %713 = vmatpush1.msra.mxu0 0.0
    %714 = vmatprep.subr.mxu0 0.0
    %715 = vmatpush1.msra.mxu0 0.0
    %716 = vmatprep.mubr.f32.mxu0 0.0
    %717 = vmatmul.mubr.f32.gmra.mrb[0].mxu0 %v573
    %v718 = vpop.f32.mrb[0].mxu0
    %v719 = vadd.f32 0.0, %v718
    %v720 = vpop.f32.mrb[0].mxu0
    %721 = vdwg.mxu0
    %v722 = vadd.f32 %v651, %v719
    %v723 = vtanh.pop %v722
    %v725 = vsel %vm202, %v646, 0
    %727 = vmatprep.subr.mxu0 0.0
    %728 = vmatpush1.msra.mxu0 %v94
    %729 = vmatprep.subr.mxu0 0.0
    %730 = vmatpush1.msra.mxu0 %v95
    %731 = vmatprep.subr.mxu0 0.0
    %732 = vmatpush1.msra.mxu0 %v96
    %733 = vmatprep.subr.mxu0 0.0
    %734 = vmatpush1.msra.mxu0 %v97
    %735 = vmatprep.subr.mxu0 0.0
    %736 = vmatpush1.msra.mxu0 0.0
    %737 = vmatprep.subr.mxu0 0.0
    %738 = vmatpush1.msra.mxu0 0.0
    %739 = vmatprep.subr.mxu0 0.0
    %740 = vmatpush1.msra.mxu0 0.0
    %741 = vmatprep.subr.mxu0 0.0
    %742 = vmatpush1.msra.mxu0 0.0
    %743 = vmatprep.subr.mxu0 0.0
    %744 = vmatpush1.msra.mxu0 0.0
    %745 = vmatprep.subr.mxu0 0.0
    %746 = vmatpush1.msra.mxu0 0.0
    %747 = vmatprep.subr.mxu0 0.0
    %748 = vmatpush1.msra.mxu0 0.0
    %749 = vmatprep.subr.mxu0 0.0
    %750 = vmatpush1.msra.mxu0 0.0
    %751 = vmatprep.subr.mxu0 0.0
    %752 = vmatpush1.msra.mxu0 0.0
    %753 = vmatprep.subr.mxu0 0.0
    %754 = vmatpush1.msra.mxu0 0.0
    %755 = vmatprep.subr.mxu0 0.0
    %756 = vmatpush1.msra.mxu0 0.0
    %757 = vmatprep.subr.mxu0 0.0
    %758 = vmatpush1.msra.mxu0 0.0
    %759 = vmatprep.subr.mxu0 0.0
    %760 = vmatpush1.msra.mxu0 0.0
    %761 = vmatprep.subr.mxu0 0.0
    %762 = vmatpush1.msra.mxu0 0.0
    %763 = vmatprep.subr.mxu0 0.0
    %764 = vmatpush1.msra.mxu0 0.0
    %765 = vmatprep.subr.mxu0 0.0
    %766 = vmatpush1.msra.mxu0 0.0
    %767 = vmatprep.subr.mxu0 0.0
    %768 = vmatpush1.msra.mxu0 0.0
    %769 = vmatprep.subr.mxu0 0.0
    %770 = vmatpush1.msra.mxu0 0.0
    %771 = vmatprep.subr.mxu0 0.0
    %772 = vmatpush1.msra.mxu0 0.0
    %773 = vmatprep.subr.mxu0 0.0
    %774 = vmatpush1.msra.mxu0 0.0
    %775 = vmatprep.subr.mxu0 0.0
    %776 = vmatpush1.msra.mxu0 0.0
    %777 = vmatprep.subr.mxu0 0.0
    %778 = vmatpush1.msra.mxu0 0.0
    %779 = vmatprep.subr.mxu0 0.0
    %780 = vmatpush1.msra.mxu0 0.0
    %781 = vmatprep.subr.mxu0 0.0
    %782 = vmatpush1.msra.mxu0 0.0
    %783 = vmatprep.subr.mxu0 0.0
    %784 = vmatpush1.msra.mxu0 0.0
    %785 = vmatprep.subr.mxu0 0.0
    %786 = vmatpush1.msra.mxu0 0.0
    %787 = vmatprep.subr.mxu0 0.0
    %788 = vmatpush1.msra.mxu0 0.0
    %789 = vmatprep.subr.mxu0 0.0
    %790 = vmatpush1.msra.mxu0 0.0
    %791 = vmatprep.mubr.f32.mxu0 0.0
    %792 = vmatmul.mubr.f32.gmra.mrb[0].mxu0 %v725
    %v793 = vpop.f32.mrb[0].mxu0
    %v794 = vadd.f32 0.0, %v793
    %v795 = vpop.f32.mrb[0].mxu0
    %796 = vdwg.mxu0
    %v798 = vsel %vm202, %v723, 0
    %800 = vmatprep.subr.mxu0 0.0
    %801 = vmatpush1.msra.mxu0 %v90
    %802 = vmatprep.subr.mxu0 0.0
    %803 = vmatpush1.msra.mxu0 %v91
    %804 = vmatprep.subr.mxu0 0.0
    %805 = vmatpush1.msra.mxu0 %v92
    %806 = vmatprep.subr.mxu0 0.0
    %807 = vmatpush1.msra.mxu0 %v93
    %808 = vmatprep.subr.mxu0 0.0
    %809 = vmatpush1.msra.mxu0 0.0
    %810 = vmatprep.subr.mxu0 0.0
    %811 = vmatpush1.msra.mxu0 0.0
    %812 = vmatprep.subr.mxu0 0.0
    %813 = vmatpush1.msra.mxu0 0.0
    %814 = vmatprep.subr.mxu0 0.0
    %815 = vmatpush1.msra.mxu0 0.0
    %816 = vmatprep.subr.mxu0 0.0
    %817 = vmatpush1.msra.mxu0 0.0
    %818 = vmatprep.subr.mxu0 0.0
    %819 = vmatpush1.msra.mxu0 0.0
    %820 = vmatprep.subr.mxu0 0.0
    %821 = vmatpush1.msra.mxu0 0.0
    %822 = vmatprep.subr.mxu0 0.0
    %823 = vmatpush1.msra.mxu0 0.0
    %824 = vmatprep.subr.mxu0 0.0
    %825 = vmatpush1.msra.mxu0 0.0
    %826 = vmatprep.subr.mxu0 0.0
    %827 = vmatpush1.msra.mxu0 0.0
    %828 = vmatprep.subr.mxu0 0.0
    %829 = vmatpush1.msra.mxu0 0.0
    %830 = vmatprep.subr.mxu0 0.0
    %831 = vmatpush1.msra.mxu0 0.0
    %832 = vmatprep.subr.mxu0 0.0
    %833 = vmatpush1.msra.mxu0 0.0
    %834 = vmatprep.subr.mxu0 0.0
    %835 = vmatpush1.msra.mxu0 0.0
    %836 = vmatprep.subr.mxu0 0.0
    %837 = vmatpush1.msra.mxu0 0.0
    %838 = vmatprep.subr.mxu0 0.0
    %839 = vmatpush1.msra.mxu0 0.0
    %840 = vmatprep.subr.mxu0 0.0
    %841 = vmatpush1.msra.mxu0 0.0
    %842 = vmatprep.subr.mxu0 0.0
    %843 = vmatpush1.msra.mxu0 0.0
    %844 = vmatprep.subr.mxu0 0.0
    %845 = vmatpush1.msra.mxu0 0.0
    %846 = vmatprep.subr.mxu0 0.0
    %847 = vmatpush1.msra.mxu0 0.0
    %848 = vmatprep.subr.mxu0 0.0
    %849 = vmatpush1.msra.mxu0 0.0
    %850 = vmatprep.subr.mxu0 0.0
    %851 = vmatpush1.msra.mxu0 0.0
    %852 = vmatprep.subr.mxu0 0.0
    %853 = vmatpush1.msra.mxu0 0.0
    %854 = vmatprep.subr.mxu0 0.0
    %855 = vmatpush1.msra.mxu0 0.0
    %856 = vmatprep.subr.mxu0 0.0
    %857 = vmatpush1.msra.mxu0 0.0
    %858 = vmatprep.subr.mxu0 0.0
    %859 = vmatpush1.msra.mxu0 0.0
    %860 = vmatprep.subr.mxu0 0.0
    %861 = vmatpush1.msra.mxu0 0.0
    %862 = vmatprep.subr.mxu0 0.0
    %863 = vmatpush1.msra.mxu0 0.0
    %864 = vmatprep.mubr.f32.mxu0 0.0
    %865 = vmatmul.mubr.f32.gmra.mrb[0].mxu0 %v798
    %v866 = vpop.f32.mrb[0].mxu0
    %v867 = vadd.f32 %v794, %v866
    %v868 = vpop.f32.mrb[0].mxu0
    %869 = vdwg.mxu0
    %v870 = vadd.f32 %v867, %v103
    %v871 = vtanh.pop %v870
    %v872 = vrot.slane %v189, 3
    %v874 = vrot.slane %v194, 2
    %v876 = vsel %vm200, %v872, %v874
    %877 = vmatprep.subr.mxu0 0.0
    %878 = vmatpush1.msra.mxu0 %v86
    %879 = vmatprep.subr.mxu0 0.0
    %880 = vmatpush1.msra.mxu0 %v87
    %881 = vmatprep.subr.mxu0 0.0
    %882 = vmatpush1.msra.mxu0 %v88
    %883 = vmatprep.subr.mxu0 0.0
    %884 = vmatpush1.msra.mxu0 %v89
    %885 = vmatprep.subr.mxu0 0.0
    %886 = vmatpush1.msra.mxu0 0.0
    %887 = vmatprep.subr.mxu0 0.0
    %888 = vmatpush1.msra.mxu0 0.0
    %889 = vmatprep.subr.mxu0 0.0
    %890 = vmatpush1.msra.mxu0 0.0
    %891 = vmatprep.subr.mxu0 0.0
    %892 = vmatpush1.msra.mxu0 0.0
    %893 = vmatprep.subr.mxu0 0.0
    %894 = vmatpush1.msra.mxu0 0.0
    %895 = vmatprep.subr.mxu0 0.0
    %896 = vmatpush1.msra.mxu0 0.0
    %897 = vmatprep.subr.mxu0 0.0
    %898 = vmatpush1.msra.mxu0 0.0
    %899 = vmatprep.subr.mxu0 0.0
    %900 = vmatpush1.msra.mxu0 0.0
    %901 = vmatprep.subr.mxu0 0.0
    %902 = vmatpush1.msra.mxu0 0.0
    %903 = vmatprep.subr.mxu0 0.0
    %904 = vmatpush1.msra.mxu0 0.0
    %905 = vmatprep.subr.mxu0 0.0
    %906 = vmatpush1.msra.mxu0 0.0
    %907 = vmatprep.subr.mxu0 0.0
    %908 = vmatpush1.msra.mxu0 0.0
    %909 = vmatprep.subr.mxu0 0.0
    %910 = vmatpush1.msra.mxu0 0.0
    %911 = vmatprep.subr.mxu0 0.0
    %912 = vmatpush1.msra.mxu0 0.0
    %913 = vmatprep.subr.mxu0 0.0
    %914 = vmatpush1.msra.mxu0 0.0
    %915 = vmatprep.subr.mxu0 0.0
    %916 = vmatpush1.msra.mxu0 0.0
    %917 = vmatprep.subr.mxu0 0.0
    %918 = vmatpush1.msra.mxu0 0.0
    %919 = vmatprep.subr.mxu0 0.0
    %920 = vmatpush1.msra.mxu0 0.0
    %921 = vmatprep.subr.mxu0 0.0
    %922 = vmatpush1.msra.mxu0 0.0
    %923 = vmatprep.subr.mxu0 0.0
    %924 = vmatpush1.msra.mxu0 0.0
    %925 = vmatprep.subr.mxu0 0.0
    %926 = vmatpush1.msra.mxu0 0.0
    %927 = vmatprep.subr.mxu0 0.0
    %928 = vmatpush1.msra.mxu0 0.0
    %929 = vmatprep.subr.mxu0 0.0
    %930 = vmatpush1.msra.mxu0 0.0
    %931 = vmatprep.subr.mxu0 0.0
    %932 = vmatpush1.msra.mxu0 0.0
    %933 = vmatprep.subr.mxu0 0.0
    %934 = vmatpush1.msra.mxu0 0.0
    %935 = vmatprep.subr.mxu0 0.0
    %936 = vmatpush1.msra.mxu0 0.0
    %937 = vmatprep.subr.mxu0 0.0
    %938 = vmatpush1.msra.mxu0 0.0
    %939 = vmatprep.subr.mxu0 0.0
    %940 = vmatpush1.msra.mxu0 0.0
    %941 = vmatprep.mubr.f32.mxu0 0.0
    %942 = vmatmul.mubr.f32.gmra.mrb[0].mxu0 %v798
    %v943 = vpop.f32.mrb[0].mxu0
    %v944 = vadd.f32 0.0, %v943
    %v945 = vpop.f32.mrb[0].mxu0
    %946 = vdwg.mxu0
    %v947 = vadd.f32 %v876, %v944
    %v948 = vtanh.pop %v947
    %v950 = vsel %vm202, %v871, 0
    %952 = vmatprep.subr.mxu0 0.0
    %953 = vmatpush1.msra.mxu0 %v94
    %954 = vmatprep.subr.mxu0 0.0
    %955 = vmatpush1.msra.mxu0 %v95
    %956 = vmatprep.subr.mxu0 0.0
    %957 = vmatpush1.msra.mxu0 %v96
    %958 = vmatprep.subr.mxu0 0.0
    %959 = vmatpush1.msra.mxu0 %v97
    %960 = vmatprep.subr.mxu0 0.0
    %961 = vmatpush1.msra.mxu0 0.0
    %962 = vmatprep.subr.mxu0 0.0
    %963 = vmatpush1.msra.mxu0 0.0
    %964 = vmatprep.subr.mxu0 0.0
    %965 = vmatpush1.msra.mxu0 0.0
    %966 = vmatprep.subr.mxu0 0.0
    %967 = vmatpush1.msra.mxu0 0.0
    %968 = vmatprep.subr.mxu0 0.0
    %969 = vmatpush1.msra.mxu0 0.0
    %970 = vmatprep.subr.mxu0 0.0
    %971 = vmatpush1.msra.mxu0 0.0
    %972 = vmatprep.subr.mxu0 0.0
    %973 = vmatpush1.msra.mxu0 0.0
    %974 = vmatprep.subr.mxu0 0.0
    %975 = vmatpush1.msra.mxu0 0.0
    %976 = vmatprep.subr.mxu0 0.0
    %977 = vmatpush1.msra.mxu0 0.0
    %978 = vmatprep.subr.mxu0 0.0
    %979 = vmatpush1.msra.mxu0 0.0
    %980 = vmatprep.subr.mxu0 0.0
    %981 = vmatpush1.msra.mxu0 0.0
    %982 = vmatprep.subr.mxu0 0.0
    %983 = vmatpush1.msra.mxu0 0.0
    %984 = vmatprep.subr.mxu0 0.0
    %985 = vmatpush1.msra.mxu0 0.0
    %986 = vmatprep.subr.mxu0 0.0
    %987 = vmatpush1.msra.mxu0 0.0
    %988 = vmatprep.subr.mxu0 0.0
    %989 = vmatpush1.msra.mxu0 0.0
    %990 = vmatprep.subr.mxu0 0.0
    %991 = vmatpush1.msra.mxu0 0.0
    %992 = vmatprep.subr.mxu0 0.0
    %993 = vmatpush1.msra.mxu0 0.0
    %994 = vmatprep.subr.mxu0 0.0
    %995 = vmatpush1.msra.mxu0 0.0
    %996 = vmatprep.subr.mxu0 0.0
    %997 = vmatpush1.msra.mxu0 0.0
    %998 = vmatprep.subr.mxu0 0.0
    %999 = vmatpush1.msra.mxu0 0.0
    %1000 = vmatprep.subr.mxu0 0.0
    %1001 = vmatpush1.msra.mxu0 0.0
    %1002 = vmatprep.subr.mxu0 0.0
    %1003 = vmatpush1.msra.mxu0 0.0
    %1004 = vmatprep.subr.mxu0 0.0
    %1005 = vmatpush1.msra.mxu0 0.0
    %1006 = vmatprep.subr.mxu0 0.0
    %1007 = vmatpush1.msra.mxu0 0.0
    %1008 = vmatprep.subr.mxu0 0.0
    %1009 = vmatpush1.msra.mxu0 0.0
    %1010 = vmatprep.subr.mxu0 0.0
    %1011 = vmatpush1.msra.mxu0 0.0
    %1012 = vmatprep.subr.mxu0 0.0
    %1013 = vmatpush1.msra.mxu0 0.0
    %1014 = vmatprep.subr.mxu0 0.0
    %1015 = vmatpush1.msra.mxu0 0.0
    %1016 = vmatprep.mubr.f32.mxu0 0.0
    %1017 = vmatmul.mubr.f32.gmra.mrb[0].mxu0 %v950
    %v1018 = vpop.f32.mrb[0].mxu0
    %v1019 = vadd.f32 0.0, %v1018
    %v1020 = vpop.f32.mrb[0].mxu0
    %1021 = vdwg.mxu0
    %v1023 = vsel %vm202, %v948, 0
    %1025 = vmatprep.subr.mxu0 0.0
    %1026 = vmatpush1.msra.mxu0 %v90
    %1027 = vmatprep.subr.mxu0 0.0
    %1028 = vmatpush1.msra.mxu0 %v91
    %1029 = vmatprep.subr.mxu0 0.0
    %1030 = vmatpush1.msra.mxu0 %v92
    %1031 = vmatprep.subr.mxu0 0.0
    %1032 = vmatpush1.msra.mxu0 %v93
    %1033 = vmatprep.subr.mxu0 0.0
    %1034 = vmatpush1.msra.mxu0 0.0
    %1035 = vmatprep.subr.mxu0 0.0
    %1036 = vmatpush1.msra.mxu0 0.0
    %1037 = vmatprep.subr.mxu0 0.0
    %1038 = vmatpush1.msra.mxu0 0.0
    %1039 = vmatprep.subr.mxu0 0.0
    %1040 = vmatpush1.msra.mxu0 0.0
    %1041 = vmatprep.subr.mxu0 0.0
    %1042 = vmatpush1.msra.mxu0 0.0
    %1043 = vmatprep.subr.mxu0 0.0
    %1044 = vmatpush1.msra.mxu0 0.0
    %1045 = vmatprep.subr.mxu0 0.0
    %1046 = vmatpush1.msra.mxu0 0.0
    %1047 = vmatprep.subr.mxu0 0.0
    %1048 = vmatpush1.msra.mxu0 0.0
    %1049 = vmatprep.subr.mxu0 0.0
    %1050 = vmatpush1.msra.mxu0 0.0
    %1051 = vmatprep.subr.mxu0 0.0
    %1052 = vmatpush1.msra.mxu0 0.0
    %1053 = vmatprep.subr.mxu0 0.0
    %1054 = vmatpush1.msra.mxu0 0.0
    %1055 = vmatprep.subr.mxu0 0.0
    %1056 = vmatpush1.msra.mxu0 0.0
    %1057 = vmatprep.subr.mxu0 0.0
    %1058 = vmatpush1.msra.mxu0 0.0
    %1059 = vmatprep.subr.mxu0 0.0
    %1060 = vmatpush1.msra.mxu0 0.0
    %1061 = vmatprep.subr.mxu0 0.0
    %1062 = vmatpush1.msra.mxu0 0.0
    %1063 = vmatprep.subr.mxu0 0.0
    %1064 = vmatpush1.msra.mxu0 0.0
    %1065 = vmatprep.subr.mxu0 0.0
    %1066 = vmatpush1.msra.mxu0 0.0
    %1067 = vmatprep.subr.mxu0 0.0
    %1068 = vmatpush1.msra.mxu0 0.0
    %1069 = vmatprep.subr.mxu0 0.0
    %1070 = vmatpush1.msra.mxu0 0.0
    %1071 = vmatprep.subr.mxu0 0.0
    %1072 = vmatpush1.msra.mxu0 0.0
    %1073 = vmatprep.subr.mxu0 0.0
    %1074 = vmatpush1.msra.mxu0 0.0
    %1075 = vmatprep.subr.mxu0 0.0
    %1076 = vmatpush1.msra.mxu0 0.0
    %1077 = vmatprep.subr.mxu0 0.0
    %1078 = vmatpush1.msra.mxu0 0.0
    %1079 = vmatprep.subr.mxu0 0.0
    %1080 = vmatpush1.msra.mxu0 0.0
    %1081 = vmatprep.subr.mxu0 0.0
    %1082 = vmatpush1.msra.mxu0 0.0
    %1083 = vmatprep.subr.mxu0 0.0
    %1084 = vmatpush1.msra.mxu0 0.0
    %1085 = vmatprep.subr.mxu0 0.0
    %1086 = vmatpush1.msra.mxu0 0.0
    %1087 = vmatprep.subr.mxu0 0.0
    %1088 = vmatpush1.msra.mxu0 0.0
    %1089 = vmatprep.mubr.f32.mxu0 0.0
    %1090 = vmatmul.mubr.f32.gmra.mrb[0].mxu0 %v1023
    %v1091 = vpop.f32.mrb[0].mxu0
    %v1092 = vadd.f32 %v1019, %v1091
    %v1093 = vpop.f32.mrb[0].mxu0
    %1094 = vdwg.mxu0
    %v1095 = vadd.f32 %v1092, %v103
    %v1096 = vtanh.pop %v1095
    %v1097 = vrot.slane %v189, 4
    %v1099 = vrot.slane %v194, 3
    %v1101 = vsel %vm200, %v1097, %v1099
    %1102 = vmatprep.subr.mxu0 0.0
    %1103 = vmatpush1.msra.mxu0 %v86
    %1104 = vmatprep.subr.mxu0 0.0
    %1105 = vmatpush1.msra.mxu0 %v87
    %1106 = vmatprep.subr.mxu0 0.0
    %1107 = vmatpush1.msra.mxu0 %v88
    %1108 = vmatprep.subr.mxu0 0.0
    %1109 = vmatpush1.msra.mxu0 %v89
    %1110 = vmatprep.subr.mxu0 0.0
    %1111 = vmatpush1.msra.mxu0 0.0
    %1112 = vmatprep.subr.mxu0 0.0
    %1113 = vmatpush1.msra.mxu0 0.0
    %1114 = vmatprep.subr.mxu0 0.0
    %1115 = vmatpush1.msra.mxu0 0.0
    %1116 = vmatprep.subr.mxu0 0.0
    %1117 = vmatpush1.msra.mxu0 0.0
    %1118 = vmatprep.subr.mxu0 0.0
    %1119 = vmatpush1.msra.mxu0 0.0
    %1120 = vmatprep.subr.mxu0 0.0
    %1121 = vmatpush1.msra.mxu0 0.0
    %1122 = vmatprep.subr.mxu0 0.0
    %1123 = vmatpush1.msra.mxu0 0.0
    %1124 = vmatprep.subr.mxu0 0.0
    %1125 = vmatpush1.msra.mxu0 0.0
    %1126 = vmatprep.subr.mxu0 0.0
    %1127 = vmatpush1.msra.mxu0 0.0
    %1128 = vmatprep.subr.mxu0 0.0
    %1129 = vmatpush1.msra.mxu0 0.0
    %1130 = vmatprep.subr.mxu0 0.0
    %1131 = vmatpush1.msra.mxu0 0.0
    %1132 = vmatprep.subr.mxu0 0.0
    %1133 = vmatpush1.msra.mxu0 0.0
    %1134 = vmatprep.subr.mxu0 0.0
    %1135 = vmatpush1.msra.mxu0 0.0
    %1136 = vmatprep.subr.mxu0 0.0
    %1137 = vmatpush1.msra.mxu0 0.0
    %1138 = vmatprep.subr.mxu0 0.0
    %1139 = vmatpush1.msra.mxu0 0.0
    %1140 = vmatprep.subr.mxu0 0.0
    %1141 = vmatpush1.msra.mxu0 0.0
    %1142 = vmatprep.subr.mxu0 0.0
    %1143 = vmatpush1.msra.mxu0 0.0
    %1144 = vmatprep.subr.mxu0 0.0
    %1145 = vmatpush1.msra.mxu0 0.0
    %1146 = vmatprep.subr.mxu0 0.0
    %1147 = vmatpush1.msra.mxu0 0.0
    %1148 = vmatprep.subr.mxu0 0.0
    %1149 = vmatpush1.msra.mxu0 0.0
    %1150 = vmatprep.subr.mxu0 0.0
    %1151 = vmatpush1.msra.mxu0 0.0
    %1152 = vmatprep.subr.mxu0 0.0
    %1153 = vmatpush1.msra.mxu0 0.0
    %1154 = vmatprep.subr.mxu0 0.0
    %1155 = vmatpush1.msra.mxu0 0.0
    %1156 = vmatprep.subr.mxu0 0.0
    %1157 = vmatpush1.msra.mxu0 0.0
    %1158 = vmatprep.subr.mxu0 0.0
    %1159 = vmatpush1.msra.mxu0 0.0
    %1160 = vmatprep.subr.mxu0 0.0
    %1161 = vmatpush1.msra.mxu0 0.0
    %1162 = vmatprep.subr.mxu0 0.0
    %1163 = vmatpush1.msra.mxu0 0.0
    %1164 = vmatprep.subr.mxu0 0.0
    %1165 = vmatpush1.msra.mxu0 0.0
    %1166 = vmatprep.mubr.f32.mxu0 0.0
    %1167 = vmatmul.mubr.f32.gmra.mrb[0].mxu0 %v1023
    %v1168 = vpop.f32.mrb[0].mxu0
    %v1169 = vadd.f32 0.0, %v1168
    %v1170 = vpop.f32.mrb[0].mxu0
    %1171 = vdwg.mxu0
    %v1172 = vadd.f32 %v1101, %v1169
    %v1173 = vtanh.pop %v1172
    %v1175 = vsel %vm202, %v1096, 0
    %1177 = vmatprep.subr.mxu0 0.0
    %1178 = vmatpush1.msra.mxu0 %v94
    %1179 = vmatprep.subr.mxu0 0.0
    %1180 = vmatpush1.msra.mxu0 %v95
    %1181 = vmatprep.subr.mxu0 0.0
    %1182 = vmatpush1.msra.mxu0 %v96
    %1183 = vmatprep.subr.mxu0 0.0
    %1184 = vmatpush1.msra.mxu0 %v97
    %1185 = vmatprep.subr.mxu0 0.0
    %1186 = vmatpush1.msra.mxu0 0.0
    %1187 = vmatprep.subr.mxu0 0.0
    %1188 = vmatpush1.msra.mxu0 0.0
    %1189 = vmatprep.subr.mxu0 0.0
    %1190 = vmatpush1.msra.mxu0 0.0
    %1191 = vmatprep.subr.mxu0 0.0
    %1192 = vmatpush1.msra.mxu0 0.0
    %1193 = vmatprep.subr.mxu0 0.0
    %1194 = vmatpush1.msra.mxu0 0.0
    %1195 = vmatprep.subr.mxu0 0.0
    %1196 = vmatpush1.msra.mxu0 0.0
    %1197 = vmatprep.subr.mxu0 0.0
    %1198 = vmatpush1.msra.mxu0 0.0
    %1199 = vmatprep.subr.mxu0 0.0
    %1200 = vmatpush1.msra.mxu0 0.0
    %1201 = vmatprep.subr.mxu0 0.0
    %1202 = vmatpush1.msra.mxu0 0.0
    %1203 = vmatprep.subr.mxu0 0.0
    %1204 = vmatpush1.msra.mxu0 0.0
    %1205 = vmatprep.subr.mxu0 0.0
    %1206 = vmatpush1.msra.mxu0 0.0
    %1207 = vmatprep.subr.mxu0 0.0
    %1208 = vmatpush1.msra.mxu0 0.0
    %1209 = vmatprep.subr.mxu0 0.0
    %1210 = vmatpush1.msra.mxu0 0.0
    %1211 = vmatprep.subr.mxu0 0.0
    %1212 = vmatpush1.msra.mxu0 0.0
    %1213 = vmatprep.subr.mxu0 0.0
    %1214 = vmatpush1.msra.mxu0 0.0
    %1215 = vmatprep.subr.mxu0 0.0
    %1216 = vmatpush1.msra.mxu0 0.0
    %1217 = vmatprep.subr.mxu0 0.0
    %1218 = vmatpush1.msra.mxu0 0.0
    %1219 = vmatprep.subr.mxu0 0.0
    %1220 = vmatpush1.msra.mxu0 0.0
    %1221 = vmatprep.subr.mxu0 0.0
    %1222 = vmatpush1.msra.mxu0 0.0
    %1223 = vmatprep.subr.mxu0 0.0
    %1224 = vmatpush1.msra.mxu0 0.0
    %1225 = vmatprep.subr.mxu0 0.0
    %1226 = vmatpush1.msra.mxu0 0.0
    %1227 = vmatprep.subr.mxu0 0.0
    %1228 = vmatpush1.msra.mxu0 0.0
    %1229 = vmatprep.subr.mxu0 0.0
    %1230 = vmatpush1.msra.mxu0 0.0
    %1231 = vmatprep.subr.mxu0 0.0
    %1232 = vmatpush1.msra.mxu0 0.0
    %1233 = vmatprep.subr.mxu0 0.0
    %1234 = vmatpush1.msra.mxu0 0.0
    %1235 = vmatprep.subr.mxu0 0.0
    %1236 = vmatpush1.msra.mxu0 0.0
    %1237 = vmatprep.subr.mxu0 0.0
    %1238 = vmatpush1.msra.mxu0 0.0
    %1239 = vmatprep.subr.mxu0 0.0
    %1240 = vmatpush1.msra.mxu0 0.0
    %1241 = vmatprep.mubr.f32.mxu0 0.0
    %1242 = vmatmul.mubr.f32.gmra.mrb[0].mxu0 %v1175
    %v1243 = vpop.f32.mrb[0].mxu0
    %v1244 = vadd.f32 0.0, %v1243
    %v1245 = vpop.f32.mrb[0].mxu0
    %1246 = vdwg.mxu0
    %v1248 = vsel %vm202, %v1173, 0
    %1250 = vmatprep.subr.mxu0 0.0
    %1251 = vmatpush1.msra.mxu0 %v90
    %1252 = vmatprep.subr.mxu0 0.0
    %1253 = vmatpush1.msra.mxu0 %v91
    %1254 = vmatprep.subr.mxu0 0.0
    %1255 = vmatpush1.msra.mxu0 %v92
    %1256 = vmatprep.subr.mxu0 0.0
    %1257 = vmatpush1.msra.mxu0 %v93
    %1258 = vmatprep.subr.mxu0 0.0
    %1259 = vmatpush1.msra.mxu0 0.0
    %1260 = vmatprep.subr.mxu0 0.0
    %1261 = vmatpush1.msra.mxu0 0.0
    %1262 = vmatprep.subr.mxu0 0.0
    %1263 = vmatpush1.msra.mxu0 0.0
    %1264 = vmatprep.subr.mxu0 0.0
    %1265 = vmatpush1.msra.mxu0 0.0
    %1266 = vmatprep.subr.mxu0 0.0
    %1267 = vmatpush1.msra.mxu0 0.0
    %1268 = vmatprep.subr.mxu0 0.0
    %1269 = vmatpush1.msra.mxu0 0.0
    %1270 = vmatprep.subr.mxu0 0.0
    %1271 = vmatpush1.msra.mxu0 0.0
    %1272 = vmatprep.subr.mxu0 0.0
    %1273 = vmatpush1.msra.mxu0 0.0
    %1274 = vmatprep.subr.mxu0 0.0
    %1275 = vmatpush1.msra.mxu0 0.0
    %1276 = vmatprep.subr.mxu0 0.0
    %1277 = vmatpush1.msra.mxu0 0.0
    %1278 = vmatprep.subr.mxu0 0.0
    %1279 = vmatpush1.msra.mxu0 0.0
    %1280 = vmatprep.subr.mxu0 0.0
    %1281 = vmatpush1.msra.mxu0 0.0
    %1282 = vmatprep.subr.mxu0 0.0
    %1283 = vmatpush1.msra.mxu0 0.0
    %1284 = vmatprep.subr.mxu0 0.0
    %1285 = vmatpush1.msra.mxu0 0.0
    %1286 = vmatprep.subr.mxu0 0.0
    %1287 = vmatpush1.msra.mxu0 0.0
    %1288 = vmatprep.subr.mxu0 0.0
    %1289 = vmatpush1.msra.mxu0 0.0
    %1290 = vmatprep.subr.mxu0 0.0
    %1291 = vmatpush1.msra.mxu0 0.0
    %1292 = vmatprep.subr.mxu0 0.0
    %1293 = vmatpush1.msra.mxu0 0.0
    %1294 = vmatprep.subr.mxu0 0.0
    %1295 = vmatpush1.msra.mxu0 0.0
    %1296 = vmatprep.subr.mxu0 0.0
    %1297 = vmatpush1.msra.mxu0 0.0
    %1298 = vmatprep.subr.mxu0 0.0
    %1299 = vmatpush1.msra.mxu0 0.0
    %1300 = vmatprep.subr.mxu0 0.0
    %1301 = vmatpush1.msra.mxu0 0.0
    %1302 = vmatprep.subr.mxu0 0.0
    %1303 = vmatpush1.msra.mxu0 0.0
    %1304 = vmatprep.subr.mxu0 0.0
    %1305 = vmatpush1.msra.mxu0 0.0
    %1306 = vmatprep.subr.mxu0 0.0
    %1307 = vmatpush1.msra.mxu0 0.0
    %1308 = vmatprep.subr.mxu0 0.0
    %1309 = vmatpush1.msra.mxu0 0.0
    %1310 = vmatprep.subr.mxu0 0.0
    %1311 = vmatpush1.msra.mxu0 0.0
    %1312 = vmatprep.subr.mxu0 0.0
    %1313 = vmatpush1.msra.mxu0 0.0
    %1314 = vmatprep.mubr.f32.mxu0 0.0
    %1315 = vmatmul.mubr.f32.gmra.mrb[0].mxu0 %v1248
    %v1316 = vpop.f32.mrb[0].mxu0
    %v1317 = vadd.f32 %v1244, %v1316
    %v1318 = vpop.f32.mrb[0].mxu0
    %1319 = vdwg.mxu0
    %v1320 = vadd.f32 %v1317, %v103
    %v1321 = vtanh.pop %v1320
    %v1322 = vrot.slane %v189, 5
    %v1324 = vrot.slane %v194, 4
    %v1326 = vsel %vm200, %v1322, %v1324
    %1327 = vmatprep.subr.mxu0 0.0
    %1328 = vmatpush1.msra.mxu0 %v86
    %1329 = vmatprep.subr.mxu0 0.0
    %1330 = vmatpush1.msra.mxu0 %v87
    %1331 = vmatprep.subr.mxu0 0.0
    %1332 = vmatpush1.msra.mxu0 %v88
    %1333 = vmatprep.subr.mxu0 0.0
    %1334 = vmatpush1.msra.mxu0 %v89
    %1335 = vmatprep.subr.mxu0 0.0
    %1336 = vmatpush1.msra.mxu0 0.0
    %1337 = vmatprep.subr.mxu0 0.0
    %1338 = vmatpush1.msra.mxu0 0.0
    %1339 = vmatprep.subr.mxu0 0.0
    %1340 = vmatpush1.msra.mxu0 0.0
    %1341 = vmatprep.subr.mxu0 0.0
    %1342 = vmatpush1.msra.mxu0 0.0
    %1343 = vmatprep.subr.mxu0 0.0
    %1344 = vmatpush1.msra.mxu0 0.0
    %1345 = vmatprep.subr.mxu0 0.0
    %1346 = vmatpush1.msra.mxu0 0.0
    %1347 = vmatprep.subr.mxu0 0.0
    %1348 = vmatpush1.msra.mxu0 0.0
    %1349 = vmatprep.subr.mxu0 0.0
    %1350 = vmatpush1.msra.mxu0 0.0
    %1351 = vmatprep.subr.mxu0 0.0
    %1352 = vmatpush1.msra.mxu0 0.0
    %1353 = vmatprep.subr.mxu0 0.0
    %1354 = vmatpush1.msra.mxu0 0.0
    %1355 = vmatprep.subr.mxu0 0.0
    %1356 = vmatpush1.msra.mxu0 0.0
    %1357 = vmatprep.subr.mxu0 0.0
    %1358 = vmatpush1.msra.mxu0 0.0
    %1359 = vmatprep.subr.mxu0 0.0
    %1360 = vmatpush1.msra.mxu0 0.0
    %1361 = vmatprep.subr.mxu0 0.0
    %1362 = vmatpush1.msra.mxu0 0.0
    %1363 = vmatprep.subr.mxu0 0.0
    %1364 = vmatpush1.msra.mxu0 0.0
    %1365 = vmatprep.subr.mxu0 0.0
    %1366 = vmatpush1.msra.mxu0 0.0
    %1367 = vmatprep.subr.mxu0 0.0
    %1368 = vmatpush1.msra.mxu0 0.0
    %1369 = vmatprep.subr.mxu0 0.0
    %1370 = vmatpush1.msra.mxu0 0.0
    %1371 = vmatprep.subr.mxu0 0.0
    %1372 = vmatpush1.msra.mxu0 0.0
    %1373 = vmatprep.subr.mxu0 0.0
    %1374 = vmatpush1.msra.mxu0 0.0
    %1375 = vmatprep.subr.mxu0 0.0
    %1376 = vmatpush1.msra.mxu0 0.0
    %1377 = vmatprep.subr.mxu0 0.0
    %1378 = vmatpush1.msra.mxu0 0.0
    %1379 = vmatprep.subr.mxu0 0.0
    %1380 = vmatpush1.msra.mxu0 0.0
    %1381 = vmatprep.subr.mxu0 0.0
    %1382 = vmatpush1.msra.mxu0 0.0
    %1383 = vmatprep.subr.mxu0 0.0
    %1384 = vmatpush1.msra.mxu0 0.0
    %1385 = vmatprep.subr.mxu0 0.0
    %1386 = vmatpush1.msra.mxu0 0.0
    %1387 = vmatprep.subr.mxu0 0.0
    %1388 = vmatpush1.msra.mxu0 0.0
    %1389 = vmatprep.subr.mxu0 0.0
    %1390 = vmatpush1.msra.mxu0 0.0
    %1391 = vmatprep.mubr.f32.mxu0 0.0
    %1392 = vmatmul.mubr.f32.gmra.mrb[0].mxu0 %v1248
    %v1393 = vpop.f32.mrb[0].mxu0
    %v1394 = vadd.f32 0.0, %v1393
    %v1395 = vpop.f32.mrb[0].mxu0
    %1396 = vdwg.mxu0
    %v1397 = vadd.f32 %v1326, %v1394
    %v1398 = vtanh.pop %v1397
    %v1400 = vsel %vm202, %v1321, 0
    %1402 = vmatprep.subr.mxu0 0.0
    %1403 = vmatpush1.msra.mxu0 %v94
    %1404 = vmatprep.subr.mxu0 0.0
    %1405 = vmatpush1.msra.mxu0 %v95
    %1406 = vmatprep.subr.mxu0 0.0
    %1407 = vmatpush1.msra.mxu0 %v96
    %1408 = vmatprep.subr.mxu0 0.0
    %1409 = vmatpush1.msra.mxu0 %v97
    %1410 = vmatprep.subr.mxu0 0.0
    %1411 = vmatpush1.msra.mxu0 0.0
    %1412 = vmatprep.subr.mxu0 0.0
    %1413 = vmatpush1.msra.mxu0 0.0
    %1414 = vmatprep.subr.mxu0 0.0
    %1415 = vmatpush1.msra.mxu0 0.0
    %1416 = vmatprep.subr.mxu0 0.0
    %1417 = vmatpush1.msra.mxu0 0.0
    %1418 = vmatprep.subr.mxu0 0.0
    %1419 = vmatpush1.msra.mxu0 0.0
    %1420 = vmatprep.subr.mxu0 0.0
    %1421 = vmatpush1.msra.mxu0 0.0
    %1422 = vmatprep.subr.mxu0 0.0
    %1423 = vmatpush1.msra.mxu0 0.0
    %1424 = vmatprep.subr.mxu0 0.0
    %1425 = vmatpush1.msra.mxu0 0.0
    %1426 = vmatprep.subr.mxu0 0.0
    %1427 = vmatpush1.msra.mxu0 0.0
    %1428 = vmatprep.subr.mxu0 0.0
    %1429 = vmatpush1.msra.mxu0 0.0
    %1430 = vmatprep.subr.mxu0 0.0
    %1431 = vmatpush1.msra.mxu0 0.0
    %1432 = vmatprep.subr.mxu0 0.0
    %1433 = vmatpush1.msra.mxu0 0.0
    %1434 = vmatprep.subr.mxu0 0.0
    %1435 = vmatpush1.msra.mxu0 0.0
    %1436 = vmatprep.subr.mxu0 0.0
    %1437 = vmatpush1.msra.mxu0 0.0
    %1438 = vmatprep.subr.mxu0 0.0
    %1439 = vmatpush1.msra.mxu0 0.0
    %1440 = vmatprep.subr.mxu0 0.0
    %1441 = vmatpush1.msra.mxu0 0.0
    %1442 = vmatprep.subr.mxu0 0.0
    %1443 = vmatpush1.msra.mxu0 0.0
    %1444 = vmatprep.subr.mxu0 0.0
    %1445 = vmatpush1.msra.mxu0 0.0
    %1446 = vmatprep.subr.mxu0 0.0
    %1447 = vmatpush1.msra.mxu0 0.0
    %1448 = vmatprep.subr.mxu0 0.0
    %1449 = vmatpush1.msra.mxu0 0.0
    %1450 = vmatprep.subr.mxu0 0.0
    %1451 = vmatpush1.msra.mxu0 0.0
    %1452 = vmatprep.subr.mxu0 0.0
    %1453 = vmatpush1.msra.mxu0 0.0
    %1454 = vmatprep.subr.mxu0 0.0
    %1455 = vmatpush1.msra.mxu0 0.0
    %1456 = vmatprep.subr.mxu0 0.0
    %1457 = vmatpush1.msra.mxu0 0.0
    %1458 = vmatprep.subr.mxu0 0.0
    %1459 = vmatpush1.msra.mxu0 0.0
    %1460 = vmatprep.subr.mxu0 0.0
    %1461 = vmatpush1.msra.mxu0 0.0
    %1462 = vmatprep.subr.mxu0 0.0
    %1463 = vmatpush1.msra.mxu0 0.0
    %1464 = vmatprep.subr.mxu0 0.0
    %1465 = vmatpush1.msra.mxu0 0.0
    %1466 = vmatprep.mubr.f32.mxu0 0.0
    %1467 = vmatmul.mubr.f32.gmra.mrb[0].mxu0 %v1400
    %v1468 = vpop.f32.mrb[0].mxu0
    %v1469 = vadd.f32 0.0, %v1468
    %v1470 = vpop.f32.mrb[0].mxu0
    %1471 = vdwg.mxu0
    %v1473 = vsel %vm202, %v1398, 0
    %1475 = vmatprep.subr.mxu0 0.0
    %1476 = vmatpush1.msra.mxu0 %v90
    %1477 = vmatprep.subr.mxu0 0.0
    %1478 = vmatpush1.msra.mxu0 %v91
    %1479 = vmatprep.subr.mxu0 0.0
    %1480 = vmatpush1.msra.mxu0 %v92
    %1481 = vmatprep.subr.mxu0 0.0
    %1482 = vmatpush1.msra.mxu0 %v93
    %1483 = vmatprep.subr.mxu0 0.0
    %1484 = vmatpush1.msra.mxu0 0.0
    %1485 = vmatprep.subr.mxu0 0.0
    %1486 = vmatpush1.msra.mxu0 0.0
    %1487 = vmatprep.subr.mxu0 0.0
    %1488 = vmatpush1.msra.mxu0 0.0
    %1489 = vmatprep.subr.mxu0 0.0
    %1490 = vmatpush1.msra.mxu0 0.0
    %1491 = vmatprep.subr.mxu0 0.0
    %1492 = vmatpush1.msra.mxu0 0.0
    %1493 = vmatprep.subr.mxu0 0.0
    %1494 = vmatpush1.msra.mxu0 0.0
    %1495 = vmatprep.subr.mxu0 0.0
    %1496 = vmatpush1.msra.mxu0 0.0
    %1497 = vmatprep.subr.mxu0 0.0
    %1498 = vmatpush1.msra.mxu0 0.0
    %1499 = vmatprep.subr.mxu0 0.0
    %1500 = vmatpush1.msra.mxu0 0.0
    %1501 = vmatprep.subr.mxu0 0.0
    %1502 = vmatpush1.msra.mxu0 0.0
    %1503 = vmatprep.subr.mxu0 0.0
    %1504 = vmatpush1.msra.mxu0 0.0
    %1505 = vmatprep.subr.mxu0 0.0
    %1506 = vmatpush1.msra.mxu0 0.0
    %1507 = vmatprep.subr.mxu0 0.0
    %1508 = vmatpush1.msra.mxu0 0.0
    %1509 = vmatprep.subr.mxu0 0.0
    %1510 = vmatpush1.msra.mxu0 0.0
    %1511 = vmatprep.subr.mxu0 0.0
    %1512 = vmatpush1.msra.mxu0 0.0
    %1513 = vmatprep.subr.mxu0 0.0
    %1514 = vmatpush1.msra.mxu0 0.0
    %1515 = vmatprep.subr.mxu0 0.0
    %1516 = vmatpush1.msra.mxu0 0.0
    %1517 = vmatprep.subr.mxu0 0.0
    %1518 = vmatpush1.msra.mxu0 0.0
    %1519 = vmatprep.subr.mxu0 0.0
    %1520 = vmatpush1.msra.mxu0 0.0
    %1521 = vmatprep.subr.mxu0 0.0
    %1522 = vmatpush1.msra.mxu0 0.0
    %1523 = vmatprep.subr.mxu0 0.0
    %1524 = vmatpush1.msra.mxu0 0.0
    %1525 = vmatprep.subr.mxu0 0.0
    %1526 = vmatpush1.msra.mxu0 0.0
    %1527 = vmatprep.subr.mxu0 0.0
    %1528 = vmatpush1.msra.mxu0 0.0
    %1529 = vmatprep.subr.mxu0 0.0
    %1530 = vmatpush1.msra.mxu0 0.0
    %1531 = vmatprep.subr.mxu0 0.0
    %1532 = vmatpush1.msra.mxu0 0.0
    %1533 = vmatprep.subr.mxu0 0.0
    %1534 = vmatpush1.msra.mxu0 0.0
    %1535 = vmatprep.subr.mxu0 0.0
    %1536 = vmatpush1.msra.mxu0 0.0
    %1537 = vmatprep.subr.mxu0 0.0
    %1538 = vmatpush1.msra.mxu0 0.0
    %1539 = vmatprep.mubr.f32.mxu0 0.0
    %1540 = vmatmul.mubr.f32.gmra.mrb[0].mxu0 %v1473
    %v1541 = vpop.f32.mrb[0].mxu0
    %v1542 = vadd.f32 %v1469, %v1541
    %v1543 = vpop.f32.mrb[0].mxu0
    %1544 = vdwg.mxu0
    %v1545 = vadd.f32 %v1542, %v103
    %v1546 = vtanh.pop %v1545
    %v1547 = vrot.slane %v189, 6
    %v1549 = vrot.slane %v194, 5
    %v1551 = vsel %vm200, %v1547, %v1549
    %1552 = vmatprep.subr.mxu0 0.0
    %1553 = vmatpush1.msra.mxu0 %v86
    %1554 = vmatprep.subr.mxu0 0.0
    %1555 = vmatpush1.msra.mxu0 %v87
    %1556 = vmatprep.subr.mxu0 0.0
    %1557 = vmatpush1.msra.mxu0 %v88
    %1558 = vmatprep.subr.mxu0 0.0
    %1559 = vmatpush1.msra.mxu0 %v89
    %1560 = vmatprep.subr.mxu0 0.0
    %1561 = vmatpush1.msra.mxu0 0.0
    %1562 = vmatprep.subr.mxu0 0.0
    %1563 = vmatpush1.msra.mxu0 0.0
    %1564 = vmatprep.subr.mxu0 0.0
    %1565 = vmatpush1.msra.mxu0 0.0
    %1566 = vmatprep.subr.mxu0 0.0
    %1567 = vmatpush1.msra.mxu0 0.0
    %1568 = vmatprep.subr.mxu0 0.0
    %1569 = vmatpush1.msra.mxu0 0.0
    %1570 = vmatprep.subr.mxu0 0.0
    %1571 = vmatpush1.msra.mxu0 0.0
    %1572 = vmatprep.subr.mxu0 0.0
    %1573 = vmatpush1.msra.mxu0 0.0
    %1574 = vmatprep.subr.mxu0 0.0
    %1575 = vmatpush1.msra.mxu0 0.0
    %1576 = vmatprep.subr.mxu0 0.0
    %1577 = vmatpush1.msra.mxu0 0.0
    %1578 = vmatprep.subr.mxu0 0.0
    %1579 = vmatpush1.msra.mxu0 0.0
    %1580 = vmatprep.subr.mxu0 0.0
    %1581 = vmatpush1.msra.mxu0 0.0
    %1582 = vmatprep.subr.mxu0 0.0
    %1583 = vmatpush1.msra.mxu0 0.0
    %1584 = vmatprep.subr.mxu0 0.0
    %1585 = vmatpush1.msra.mxu0 0.0
    %1586 = vmatprep.subr.mxu0 0.0
    %1587 = vmatpush1.msra.mxu0 0.0
    %1588 = vmatprep.subr.mxu0 0.0
    %1589 = vmatpush1.msra.mxu0 0.0
    %1590 = vmatprep.subr.mxu0 0.0
    %1591 = vmatpush1.msra.mxu0 0.0
    %1592 = vmatprep.subr.mxu0 0.0
    %1593 = vmatpush1.msra.mxu0 0.0
    %1594 = vmatprep.subr.mxu0 0.0
    %1595 = vmatpush1.msra.mxu0 0.0
    %1596 = vmatprep.subr.mxu0 0.0
    %1597 = vmatpush1.msra.mxu0 0.0
    %1598 = vmatprep.subr.mxu0 0.0
    %1599 = vmatpush1.msra.mxu0 0.0
    %1600 = vmatprep.subr.mxu0 0.0
    %1601 = vmatpush1.msra.mxu0 0.0
    %1602 = vmatprep.subr.mxu0 0.0
    %1603 = vmatpush1.msra.mxu0 0.0
    %1604 = vmatprep.subr.mxu0 0.0
    %1605 = vmatpush1.msra.mxu0 0.0
    %1606 = vmatprep.subr.mxu0 0.0
    %1607 = vmatpush1.msra.mxu0 0.0
    %1608 = vmatprep.subr.mxu0 0.0
    %1609 = vmatpush1.msra.mxu0 0.0
    %1610 = vmatprep.subr.mxu0 0.0
    %1611 = vmatpush1.msra.mxu0 0.0
    %1612 = vmatprep.subr.mxu0 0.0
    %1613 = vmatpush1.msra.mxu0 0.0
    %1614 = vmatprep.subr.mxu0 0.0
    %1615 = vmatpush1.msra.mxu0 0.0
    %1616 = vmatprep.mubr.f32.mxu0 0.0
    %1617 = vmatmul.mubr.f32.gmra.mrb[0].mxu0 %v1473
    %v1618 = vpop.f32.mrb[0].mxu0
    %v1619 = vadd.f32 0.0, %v1618
    %v1620 = vpop.f32.mrb[0].mxu0
    %1621 = vdwg.mxu0
    %v1622 = vadd.f32 %v1551, %v1619
    %v1623 = vtanh.pop %v1622
    %v1625 = vsel %vm202, %v1546, 0
    %1627 = vmatprep.subr.mxu0 0.0
    %1628 = vmatpush1.msra.mxu0 %v94
    %1629 = vmatprep.subr.mxu0 0.0
    %1630 = vmatpush1.msra.mxu0 %v95
    %1631 = vmatprep.subr.mxu0 0.0
    %1632 = vmatpush1.msra.mxu0 %v96
    %1633 = vmatprep.subr.mxu0 0.0
    %1634 = vmatpush1.msra.mxu0 %v97
    %1635 = vmatprep.subr.mxu0 0.0
    %1636 = vmatpush1.msra.mxu0 0.0
    %1637 = vmatprep.subr.mxu0 0.0
    %1638 = vmatpush1.msra.mxu0 0.0
    %1639 = vmatprep.subr.mxu0 0.0
    %1640 = vmatpush1.msra.mxu0 0.0
    %1641 = vmatprep.subr.mxu0 0.0
    %1642 = vmatpush1.msra.mxu0 0.0
    %1643 = vmatprep.subr.mxu0 0.0
    %1644 = vmatpush1.msra.mxu0 0.0
    %1645 = vmatprep.subr.mxu0 0.0
    %1646 = vmatpush1.msra.mxu0 0.0
    %1647 = vmatprep.subr.mxu0 0.0
    %1648 = vmatpush1.msra.mxu0 0.0
    %1649 = vmatprep.subr.mxu0 0.0
    %1650 = vmatpush1.msra.mxu0 0.0
    %1651 = vmatprep.subr.mxu0 0.0
    %1652 = vmatpush1.msra.mxu0 0.0
    %1653 = vmatprep.subr.mxu0 0.0
    %1654 = vmatpush1.msra.mxu0 0.0
    %1655 = vmatprep.subr.mxu0 0.0
    %1656 = vmatpush1.msra.mxu0 0.0
    %1657 = vmatprep.subr.mxu0 0.0
    %1658 = vmatpush1.msra.mxu0 0.0
    %1659 = vmatprep.subr.mxu0 0.0
    %1660 = vmatpush1.msra.mxu0 0.0
    %1661 = vmatprep.subr.mxu0 0.0
    %1662 = vmatpush1.msra.mxu0 0.0
    %1663 = vmatprep.subr.mxu0 0.0
    %1664 = vmatpush1.msra.mxu0 0.0
    %1665 = vmatprep.subr.mxu0 0.0
    %1666 = vmatpush1.msra.mxu0 0.0
    %1667 = vmatprep.subr.mxu0 0.0
    %1668 = vmatpush1.msra.mxu0 0.0
    %1669 = vmatprep.subr.mxu0 0.0
    %1670 = vmatpush1.msra.mxu0 0.0
    %1671 = vmatprep.subr.mxu0 0.0
    %1672 = vmatpush1.msra.mxu0 0.0
    %1673 = vmatprep.subr.mxu0 0.0
    %1674 = vmatpush1.msra.mxu0 0.0
    %1675 = vmatprep.subr.mxu0 0.0
    %1676 = vmatpush1.msra.mxu0 0.0
    %1677 = vmatprep.subr.mxu0 0.0
    %1678 = vmatpush1.msra.mxu0 0.0
    %1679 = vmatprep.subr.mxu0 0.0
    %1680 = vmatpush1.msra.mxu0 0.0
    %1681 = vmatprep.subr.mxu0 0.0
    %1682 = vmatpush1.msra.mxu0 0.0
    %1683 = vmatprep.subr.mxu0 0.0
    %1684 = vmatpush1.msra.mxu0 0.0
    %1685 = vmatprep.subr.mxu0 0.0
    %1686 = vmatpush1.msra.mxu0 0.0
    %1687 = vmatprep.subr.mxu0 0.0
    %1688 = vmatpush1.msra.mxu0 0.0
    %1689 = vmatprep.subr.mxu0 0.0
    %1690 = vmatpush1.msra.mxu0 0.0
    %1691 = vmatprep.mubr.f32.mxu0 0.0
    %1692 = vmatmul.mubr.f32.gmra.mrb[0].mxu0 %v1625
    %v1693 = vpop.f32.mrb[0].mxu0
    %v1694 = vadd.f32 0.0, %v1693
    %v1695 = vpop.f32.mrb[0].mxu0
    %1696 = vdwg.mxu0
    %v1698 = vsel %vm202, %v1623, 0
    %1700 = vmatprep.subr.mxu0 0.0
    %1701 = vmatpush1.msra.mxu0 %v90
    %1702 = vmatprep.subr.mxu0 0.0
    %1703 = vmatpush1.msra.mxu0 %v91
    %1704 = vmatprep.subr.mxu0 0.0
    %1705 = vmatpush1.msra.mxu0 %v92
    %1706 = vmatprep.subr.mxu0 0.0
    %1707 = vmatpush1.msra.mxu0 %v93
    %1708 = vmatprep.subr.mxu0 0.0
    %1709 = vmatpush1.msra.mxu0 0.0
    %1710 = vmatprep.subr.mxu0 0.0
    %1711 = vmatpush1.msra.mxu0 0.0
    %1712 = vmatprep.subr.mxu0 0.0
    %1713 = vmatpush1.msra.mxu0 0.0
    %1714 = vmatprep.subr.mxu0 0.0
    %1715 = vmatpush1.msra.mxu0 0.0
    %1716 = vmatprep.subr.mxu0 0.0
    %1717 = vmatpush1.msra.mxu0 0.0
    %1718 = vmatprep.subr.mxu0 0.0
    %1719 = vmatpush1.msra.mxu0 0.0
    %1720 = vmatprep.subr.mxu0 0.0
    %1721 = vmatpush1.msra.mxu0 0.0
    %1722 = vmatprep.subr.mxu0 0.0
    %1723 = vmatpush1.msra.mxu0 0.0
    %1724 = vmatprep.subr.mxu0 0.0
    %1725 = vmatpush1.msra.mxu0 0.0
    %1726 = vmatprep.subr.mxu0 0.0
    %1727 = vmatpush1.msra.mxu0 0.0
    %1728 = vmatprep.subr.mxu0 0.0
    %1729 = vmatpush1.msra.mxu0 0.0
    %1730 = vmatprep.subr.mxu0 0.0
    %1731 = vmatpush1.msra.mxu0 0.0
    %1732 = vmatprep.subr.mxu0 0.0
    %1733 = vmatpush1.msra.mxu0 0.0
    %1734 = vmatprep.subr.mxu0 0.0
    %1735 = vmatpush1.msra.mxu0 0.0
    %1736 = vmatprep.subr.mxu0 0.0
    %1737 = vmatpush1.msra.mxu0 0.0
    %1738 = vmatprep.subr.mxu0 0.0
    %1739 = vmatpush1.msra.mxu0 0.0
    %1740 = vmatprep.subr.mxu0 0.0
    %1741 = vmatpush1.msra.mxu0 0.0
    %1742 = vmatprep.subr.mxu0 0.0
    %1743 = vmatpush1.msra.mxu0 0.0
    %1744 = vmatprep.subr.mxu0 0.0
    %1745 = vmatpush1.msra.mxu0 0.0
    %1746 = vmatprep.subr.mxu0 0.0
    %1747 = vmatpush1.msra.mxu0 0.0
    %1748 = vmatprep.subr.mxu0 0.0
    %1749 = vmatpush1.msra.mxu0 0.0
    %1750 = vmatprep.subr.mxu0 0.0
    %1751 = vmatpush1.msra.mxu0 0.0
    %1752 = vmatprep.subr.mxu0 0.0
    %1753 = vmatpush1.msra.mxu0 0.0
    %1754 = vmatprep.subr.mxu0 0.0
    %1755 = vmatpush1.msra.mxu0 0.0
    %1756 = vmatprep.subr.mxu0 0.0
    %1757 = vmatpush1.msra.mxu0 0.0
    %1758 = vmatprep.subr.mxu0 0.0
    %1759 = vmatpush1.msra.mxu0 0.0
    %1760 = vmatprep.subr.mxu0 0.0
    %1761 = vmatpush1.msra.mxu0 0.0
    %1762 = vmatprep.subr.mxu0 0.0
    %1763 = vmatpush1.msra.mxu0 0.0
    %1764 = vmatprep.mubr.f32.mxu0 0.0
    %1765 = vmatmul.mubr.f32.gmra.mrb[0].mxu0 %v1698
    %v1766 = vpop.f32.mrb[0].mxu0
    %v1767 = vadd.f32 %v1694, %v1766
    %v1768 = vpop.f32.mrb[0].mxu0
    %1769 = vdwg.mxu0
    %v1770 = vadd.f32 %v1767, %v103
    %v1771 = vtanh.pop %v1770
    %v1772 = vrot.slane %v189, 7
    %v1774 = vrot.slane %v194, 6
    %v1776 = vsel %vm200, %v1772, %v1774
    %1777 = vmatprep.subr.mxu0 0.0
    %1778 = vmatpush1.msra.mxu0 %v86
    %1779 = vmatprep.subr.mxu0 0.0
    %1780 = vmatpush1.msra.mxu0 %v87
    %1781 = vmatprep.subr.mxu0 0.0
    %1782 = vmatpush1.msra.mxu0 %v88
    %1783 = vmatprep.subr.mxu0 0.0
    %1784 = vmatpush1.msra.mxu0 %v89
    %1785 = vmatprep.subr.mxu0 0.0
    %1786 = vmatpush1.msra.mxu0 0.0
    %1787 = vmatprep.subr.mxu0 0.0
    %1788 = vmatpush1.msra.mxu0 0.0
    %1789 = vmatprep.subr.mxu0 0.0
    %1790 = vmatpush1.msra.mxu0 0.0
    %1791 = vmatprep.subr.mxu0 0.0
    %1792 = vmatpush1.msra.mxu0 0.0
    %1793 = vmatprep.subr.mxu0 0.0
    %1794 = vmatpush1.msra.mxu0 0.0
    %1795 = vmatprep.subr.mxu0 0.0
    %1796 = vmatpush1.msra.mxu0 0.0
    %1797 = vmatprep.subr.mxu0 0.0
    %1798 = vmatpush1.msra.mxu0 0.0
    %1799 = vmatprep.subr.mxu0 0.0
    %1800 = vmatpush1.msra.mxu0 0.0
    %1801 = vmatprep.subr.mxu0 0.0
    %1802 = vmatpush1.msra.mxu0 0.0
    %1803 = vmatprep.subr.mxu0 0.0
    %1804 = vmatpush1.msra.mxu0 0.0
    %1805 = vmatprep.subr.mxu0 0.0
    %1806 = vmatpush1.msra.mxu0 0.0
    %1807 = vmatprep.subr.mxu0 0.0
    %1808 = vmatpush1.msra.mxu0 0.0
    %1809 = vmatprep.subr.mxu0 0.0
    %1810 = vmatpush1.msra.mxu0 0.0
    %1811 = vmatprep.subr.mxu0 0.0
    %1812 = vmatpush1.msra.mxu0 0.0
    %1813 = vmatprep.subr.mxu0 0.0
    %1814 = vmatpush1.msra.mxu0 0.0
    %1815 = vmatprep.subr.mxu0 0.0
    %1816 = vmatpush1.msra.mxu0 0.0
    %1817 = vmatprep.subr.mxu0 0.0
    %1818 = vmatpush1.msra.mxu0 0.0
    %1819 = vmatprep.subr.mxu0 0.0
    %1820 = vmatpush1.msra.mxu0 0.0
    %1821 = vmatprep.subr.mxu0 0.0
    %1822 = vmatpush1.msra.mxu0 0.0
    %1823 = vmatprep.subr.mxu0 0.0
    %1824 = vmatpush1.msra.mxu0 0.0
    %1825 = vmatprep.subr.mxu0 0.0
    %1826 = vmatpush1.msra.mxu0 0.0
    %1827 = vmatprep.subr.mxu0 0.0
    %1828 = vmatpush1.msra.mxu0 0.0
    %1829 = vmatprep.subr.mxu0 0.0
    %1830 = vmatpush1.msra.mxu0 0.0
    %1831 = vmatprep.subr.mxu0 0.0
    %1832 = vmatpush1.msra.mxu0 0.0
    %1833 = vmatprep.subr.mxu0 0.0
    %1834 = vmatpush1.msra.mxu0 0.0
    %1835 = vmatprep.subr.mxu0 0.0
    %1836 = vmatpush1.msra.mxu0 0.0
    %1837 = vmatprep.subr.mxu0 0.0
    %1838 = vmatpush1.msra.mxu0 0.0
    %1839 = vmatprep.subr.mxu0 0.0
    %1840 = vmatpush1.msra.mxu0 0.0
    %1841 = vmatprep.mubr.f32.mxu0 0.0
    %1842 = vmatmul.mubr.f32.gmra.mrb[0].mxu0 %v1698
    %v1843 = vpop.f32.mrb[0].mxu0
    %v1844 = vadd.f32 0.0, %v1843
    %v1845 = vpop.f32.mrb[0].mxu0
    %1846 = vdwg.mxu0
    %v1847 = vadd.f32 %v1776, %v1844
    %v1848 = vtanh.pop %v1847
    %v1850 = vsel %vm202, %v1771, 0
    %1852 = vmatprep.subr.mxu0 0.0
    %1853 = vmatpush1.msra.mxu0 %v94
    %1854 = vmatprep.subr.mxu0 0.0
    %1855 = vmatpush1.msra.mxu0 %v95
    %1856 = vmatprep.subr.mxu0 0.0
    %1857 = vmatpush1.msra.mxu0 %v96
    %1858 = vmatprep.subr.mxu0 0.0
    %1859 = vmatpush1.msra.mxu0 %v97
    %1860 = vmatprep.subr.mxu0 0.0
    %1861 = vmatpush1.msra.mxu0 0.0
    %1862 = vmatprep.subr.mxu0 0.0
    %1863 = vmatpush1.msra.mxu0 0.0
    %1864 = vmatprep.subr.mxu0 0.0
    %1865 = vmatpush1.msra.mxu0 0.0
    %1866 = vmatprep.subr.mxu0 0.0
    %1867 = vmatpush1.msra.mxu0 0.0
    %1868 = vmatprep.subr.mxu0 0.0
    %1869 = vmatpush1.msra.mxu0 0.0
    %1870 = vmatprep.subr.mxu0 0.0
    %1871 = vmatpush1.msra.mxu0 0.0
    %1872 = vmatprep.subr.mxu0 0.0
    %1873 = vmatpush1.msra.mxu0 0.0
    %1874 = vmatprep.subr.mxu0 0.0
    %1875 = vmatpush1.msra.mxu0 0.0
    %1876 = vmatprep.subr.mxu0 0.0
    %1877 = vmatpush1.msra.mxu0 0.0
    %1878 = vmatprep.subr.mxu0 0.0
    %1879 = vmatpush1.msra.mxu0 0.0
    %1880 = vmatprep.subr.mxu0 0.0
    %1881 = vmatpush1.msra.mxu0 0.0
    %1882 = vmatprep.subr.mxu0 0.0
    %1883 = vmatpush1.msra.mxu0 0.0
    %1884 = vmatprep.subr.mxu0 0.0
    %1885 = vmatpush1.msra.mxu0 0.0
    %1886 = vmatprep.subr.mxu0 0.0
    %1887 = vmatpush1.msra.mxu0 0.0
    %1888 = vmatprep.subr.mxu0 0.0
    %1889 = vmatpush1.msra.mxu0 0.0
    %1890 = vmatprep.subr.mxu0 0.0
    %1891 = vmatpush1.msra.mxu0 0.0
    %1892 = vmatprep.subr.mxu0 0.0
    %1893 = vmatpush1.msra.mxu0 0.0
    %1894 = vmatprep.subr.mxu0 0.0
    %1895 = vmatpush1.msra.mxu0 0.0
    %1896 = vmatprep.subr.mxu0 0.0
    %1897 = vmatpush1.msra.mxu0 0.0
    %1898 = vmatprep.subr.mxu0 0.0
    %1899 = vmatpush1.msra.mxu0 0.0
    %1900 = vmatprep.subr.mxu0 0.0
    %1901 = vmatpush1.msra.mxu0 0.0
    %1902 = vmatprep.subr.mxu0 0.0
    %1903 = vmatpush1.msra.mxu0 0.0
    %1904 = vmatprep.subr.mxu0 0.0
    %1905 = vmatpush1.msra.mxu0 0.0
    %1906 = vmatprep.subr.mxu0 0.0
    %1907 = vmatpush1.msra.mxu0 0.0
    %1908 = vmatprep.subr.mxu0 0.0
    %1909 = vmatpush1.msra.mxu0 0.0
    %1910 = vmatprep.subr.mxu0 0.0
    %1911 = vmatpush1.msra.mxu0 0.0
    %1912 = vmatprep.subr.mxu0 0.0
    %1913 = vmatpush1.msra.mxu0 0.0
    %1914 = vmatprep.subr.mxu0 0.0
    %1915 = vmatpush1.msra.mxu0 0.0
    %1916 = vmatprep.mubr.f32.mxu0 0.0
    %1917 = vmatmul.mubr.f32.gmra.mrb[0].mxu0 %v1850
    %v1918 = vpop.f32.mrb[0].mxu0
    %v1919 = vadd.f32 0.0, %v1918
    %v1920 = vpop.f32.mrb[0].mxu0
    %1921 = vdwg.mxu0
    %v1923 = vsel %vm202, %v1848, 0
    %1925 = vmatprep.subr.mxu0 0.0
    %1926 = vmatpush1.msra.mxu0 %v90
    %1927 = vmatprep.subr.mxu0 0.0
    %1928 = vmatpush1.msra.mxu0 %v91
    %1929 = vmatprep.subr.mxu0 0.0
    %1930 = vmatpush1.msra.mxu0 %v92
    %1931 = vmatprep.subr.mxu0 0.0
    %1932 = vmatpush1.msra.mxu0 %v93
    %1933 = vmatprep.subr.mxu0 0.0
    %1934 = vmatpush1.msra.mxu0 0.0
    %1935 = vmatprep.subr.mxu0 0.0
    %1936 = vmatpush1.msra.mxu0 0.0
    %1937 = vmatprep.subr.mxu0 0.0
    %1938 = vmatpush1.msra.mxu0 0.0
    %1939 = vmatprep.subr.mxu0 0.0
    %1940 = vmatpush1.msra.mxu0 0.0
    %1941 = vmatprep.subr.mxu0 0.0
    %1942 = vmatpush1.msra.mxu0 0.0
    %1943 = vmatprep.subr.mxu0 0.0
    %1944 = vmatpush1.msra.mxu0 0.0
    %1945 = vmatprep.subr.mxu0 0.0
    %1946 = vmatpush1.msra.mxu0 0.0
    %1947 = vmatprep.subr.mxu0 0.0
    %1948 = vmatpush1.msra.mxu0 0.0
    %1949 = vmatprep.subr.mxu0 0.0
    %1950 = vmatpush1.msra.mxu0 0.0
    %1951 = vmatprep.subr.mxu0 0.0
    %1952 = vmatpush1.msra.mxu0 0.0
    %1953 = vmatprep.subr.mxu0 0.0
    %1954 = vmatpush1.msra.mxu0 0.0
    %1955 = vmatprep.subr.mxu0 0.0
    %1956 = vmatpush1.msra.mxu0 0.0
    %1957 = vmatprep.subr.mxu0 0.0
    %1958 = vmatpush1.msra.mxu0 0.0
    %1959 = vmatprep.subr.mxu0 0.0
    %1960 = vmatpush1.msra.mxu0 0.0
    %1961 = vmatprep.subr.mxu0 0.0
    %1962 = vmatpush1.msra.mxu0 0.0
    %1963 = vmatprep.subr.mxu0 0.0
    %1964 = vmatpush1.msra.mxu0 0.0
    %1965 = vmatprep.subr.mxu0 0.0
    %1966 = vmatpush1.msra.mxu0 0.0
    %1967 = vmatprep.subr.mxu0 0.0
    %1968 = vmatpush1.msra.mxu0 0.0
    %1969 = vmatprep.subr.mxu0 0.0
    %1970 = vmatpush1.msra.mxu0 0.0
    %1971 = vmatprep.subr.mxu0 0.0
    %1972 = vmatpush1.msra.mxu0 0.0
    %1973 = vmatprep.subr.mxu0 0.0
    %1974 = vmatpush1.msra.mxu0 0.0
    %1975 = vmatprep.subr.mxu0 0.0
    %1976 = vmatpush1.msra.mxu0 0.0
    %1977 = vmatprep.subr.mxu0 0.0
    %1978 = vmatpush1.msra.mxu0 0.0
    %1979 = vmatprep.subr.mxu0 0.0
    %1980 = vmatpush1.msra.mxu0 0.0
    %1981 = vmatprep.subr.mxu0 0.0
    %1982 = vmatpush1.msra.mxu0 0.0
    %1983 = vmatprep.subr.mxu0 0.0
    %1984 = vmatpush1.msra.mxu0 0.0
    %1985 = vmatprep.subr.mxu0 0.0
    %1986 = vmatpush1.msra.mxu0 0.0
    %1987 = vmatprep.subr.mxu0 0.0
    %1988 = vmatpush1.msra.mxu0 0.0
    %1989 = vmatprep.mubr.f32.mxu0 0.0
    %1990 = vmatmul.mubr.f32.gmra.mrb[0].mxu0 %v1923
    %v1991 = vpop.f32.mrb[0].mxu0
    %v1992 = vadd.f32 %v1919, %v1991
    %v1993 = vpop.f32.mrb[0].mxu0
    %1994 = vdwg.mxu0
    %v1995 = vadd.f32 %v1992, %v103
    %v1996 = vtanh.pop %v1995
    %vm1997 = vcmask 254976
    %1998 = vst.msk [vmem:[#allocation10] sm:$0x3] %vm1997, %v1848
    %s1999 = scalar_lea.vmem [#allocation10], 2
    %2000 = vst.msk [vmem:[%s1999] sm:$0x3] %vm1997, %v1996
    %v2001 = vrot.slane %v646, 7
    %v2003 = vrot.slane %v871, 6
    %v2005 = vrot.slane %v1096, 5
    %v2007 = vrot.slane %v1321, 4
    %v2009 = vrot.slane %v1546, 3
    %v2011 = vrot.slane %v1771, 2
    %v2014 = vrot.slane %v1996, 1
    %v2016 = vrot.slane %v422, 1
    %v2018 = vrot.slane %v871, 7
    %v2020 = vrot.slane %v1096, 6
    %v2022 = vrot.slane %v1321, 5
    %v2024 = vrot.slane %v1546, 4
    %v2026 = vrot.slane %v1771, 3
    %v2028 = vrot.slane %v1996, 2
    %v2030 = vsel %vm200, %v422, %v2001
    %vm2031 = vcmask 1041408
    %v2032 = vsel %vm2031, %v2030, %v2003
    %vm2033 = vcmask 1042432
    %v2034 = vsel %vm2033, %v2032, %v2005
    %vm2035 = vcmask 1043456
    %v2036 = vsel %vm2035, %v2034, %v2007
    %vm2037 = vcmask 1044480
    %v2038 = vsel %vm2037, %v2036, %v2009
    %vm2039 = vcmask 1045504
    %v2040 = vsel %vm2039, %v2038, %v2011
    %vm2041 = vcmask 1046528
    %v2042 = vsel %vm2041, %v2040, %v2014
    %v2043 = vsel %vm200, %v2016, %v646
    %v2044 = vsel %vm2031, %v2043, %v2018
    %v2045 = vsel %vm2033, %v2044, %v2020
    %v2046 = vsel %vm2035, %v2045, %v2022
    %v2047 = vsel %vm2037, %v2046, %v2024
    %v2048 = vsel %vm2039, %v2047, %v2026
    %v2049 = vsel %vm2041, %v2048, %v2028
    %v2050 = vld [vmem:[%s7] sm:$0xff]
    %v2051 = vld [vmem:[%s7 + $0x8] sm:$0xff]
    %v2052 = vld [vmem:[%s7 + $0x10] sm:$0xff]
    %v2053 = vld [vmem:[%s7 + $0x18] sm:$0xff]
    %v2054 = vld [vmem:[#allocation8] sm:$0x1]
    %v2056 = vlaneseq
    %v2057 = vshrl.u32 %v2056, 7
    %v2058 = vsub.s32 0, %v2057
    %v2059 = vrot.slane %v2054, %v2058
    %v2062 = vsel %vm202, %v2042, 0
    %v2065 = vsel %vm202, %v2049, 0
    %2067 = vmatprep.subr.mxu0 0.0
    %2068 = vmatpush1.msra.mxu0 %v2050
    %2069 = vmatprep.subr.mxu0 0.0
    %2070 = vmatpush1.msra.mxu0 %v2051
    %2071 = vmatprep.subr.mxu0 0.0
    %2072 = vmatpush1.msra.mxu0 %v2052
    %2073 = vmatprep.subr.mxu0 0.0
    %2074 = vmatpush1.msra.mxu0 %v2053
    %2075 = vmatprep.subr.mxu0 0.0
    %2076 = vmatpush1.msra.mxu0 0.0
    %2077 = vmatprep.subr.mxu0 0.0
    %2078 = vmatpush1.msra.mxu0 0.0
    %2079 = vmatprep.subr.mxu0 0.0
    %2080 = vmatpush1.msra.mxu0 0.0
    %2081 = vmatprep.subr.mxu0 0.0
    %2082 = vmatpush1.msra.mxu0 0.0
    %2083 = vmatprep.subr.mxu0 0.0
    %2084 = vmatpush1.msra.mxu0 0.0
    %2085 = vmatprep.subr.mxu0 0.0
    %2086 = vmatpush1.msra.mxu0 0.0
    %2087 = vmatprep.subr.mxu0 0.0
    %2088 = vmatpush1.msra.mxu0 0.0
    %2089 = vmatprep.subr.mxu0 0.0
    %2090 = vmatpush1.msra.mxu0 0.0
    %2091 = vmatprep.subr.mxu0 0.0
    %2092 = vmatpush1.msra.mxu0 0.0
    %2093 = vmatprep.subr.mxu0 0.0
    %2094 = vmatpush1.msra.mxu0 0.0
    %2095 = vmatprep.subr.mxu0 0.0
    %2096 = vmatpush1.msra.mxu0 0.0
    %2097 = vmatprep.subr.mxu0 0.0
    %2098 = vmatpush1.msra.mxu0 0.0
    %2099 = vmatprep.subr.mxu0 0.0
    %2100 = vmatpush1.msra.mxu0 0.0
    %2101 = vmatprep.subr.mxu0 0.0
    %2102 = vmatpush1.msra.mxu0 0.0
    %2103 = vmatprep.subr.mxu0 0.0
    %2104 = vmatpush1.msra.mxu0 0.0
    %2105 = vmatprep.subr.mxu0 0.0
    %2106 = vmatpush1.msra.mxu0 0.0
    %2107 = vmatprep.subr.mxu0 0.0
    %2108 = vmatpush1.msra.mxu0 0.0
    %2109 = vmatprep.subr.mxu0 0.0
    %2110 = vmatpush1.msra.mxu0 0.0
    %2111 = vmatprep.subr.mxu0 0.0
    %2112 = vmatpush1.msra.mxu0 0.0
    %2113 = vmatprep.subr.mxu0 0.0
    %2114 = vmatpush1.msra.mxu0 0.0
    %2115 = vmatprep.subr.mxu0 0.0
    %2116 = vmatpush1.msra.mxu0 0.0
    %2117 = vmatprep.subr.mxu0 0.0
    %2118 = vmatpush1.msra.mxu0 0.0
    %2119 = vmatprep.subr.mxu0 0.0
    %2120 = vmatpush1.msra.mxu0 0.0
    %2121 = vmatprep.subr.mxu0 0.0
    %2122 = vmatpush1.msra.mxu0 0.0
    %2123 = vmatprep.subr.mxu0 0.0
    %2124 = vmatpush1.msra.mxu0 0.0
    %2125 = vmatprep.subr.mxu0 0.0
    %2126 = vmatpush1.msra.mxu0 0.0
    %2127 = vmatprep.subr.mxu0 0.0
    %2128 = vmatpush1.msra.mxu0 0.0
    %2129 = vmatprep.subr.mxu0 0.0
    %2130 = vmatpush1.msra.mxu0 0.0
    %2131 = vmatprep.mubr.f32.mxu0 0.0
    %2132 = vmatmul.mubr.f32.gmra.mrb[0].mxu0 %v2062
    %v2133 = vpop.f32.mrb[0].mxu0
    %v2134 = vadd.f32 %v2059, %v2133
    %v2135 = vpop.f32.mrb[0].mxu0
    %2136 = vmatprep.mubr.f32.mxu0 0.0
    %2137 = vmatmul.mubr.f32.gmra.mrb[0].mxu0 %v2065
    %v2138 = vpop.f32.mrb[0].mxu0
    %v2139 = vadd.f32 %v2059, %v2138
    %v2140 = vpop.f32.mrb[0].mxu0
    %2141 = vdwg.mxu0
    %vm2142 = vcmask 31744
    %2143 = vst.msk [vmem:[%s9] sm:$0xff] %vm2142, %v2134
    %2144 = vst.msk [vmem:[%s9 + $0x8] sm:$0xff] %vm2142, %v2139
    // Predicated region
    $region54: #{rnn_model_forward.1} parent=1 // pred_check
      _
    $region55: #{rnn_model_forward.1} parent=1 // pred_check_branch
      %2146 = sbr.rel (0) target = $region57
    $region56: #{rnn_model_forward.1} parent=1 // pred_region
      _
    $region57: #{rnn_model_forward.1} parent=1 // pred_fallthru
      _
    // Predicated region
    $region58: #{rnn_model_forward.1} parent=1 // pred_check
      _
    $region59: #{rnn_model_forward.1} parent=1 // pred_check_branch
      %2148 = sbr.rel (0) target = $region61
    $region60: #{rnn_model_forward.1} parent=1 // pred_region
      %s2150 = ssub.s32 64, 64
      %2151 = vsyncadd [#allocation4], %s2150
      %s2152 = sshll.u32 [#allocation10], 4
      %s2153 = int_to_ptr.vmem [resolvable:$true] %s2152
      %2158 = dma.vmem_to_hbm [thread:$0]  %s2153, 64, %s10, [#allocation4], 32, 32, 2
    $region61: #{rnn_model_forward.1} parent=1 // pred_fallthru
      _
    // Predicated region
    $region62: #{rnn_model_forward.1} parent=1 // pred_check
      _
    $region63: #{rnn_model_forward.1} parent=1 // pred_check_branch
      %2160 = sbr.rel (0) target = $region65
    $region64: #{rnn_model_forward.1} parent=1 // pred_region
      _
    $region65: #{rnn_model_forward.1} parent=1 // pred_fallthru
      _
    // Predicated region
    $region66: #{rnn_model_forward.1} parent=1 // pred_check
      _
    $region67: #{rnn_model_forward.1} parent=1 // pred_check_branch
      %2162 = sbr.rel (0) target = $region69
    $region68: #{rnn_model_forward.1} parent=1 // pred_region
      %2163 = dma.done [#allocation4], 64
    $region69: #{rnn_model_forward.1} parent=1 // pred_fallthru
      _
    %2164 = vsyncpa [#allocation3], 1
    %2165 = vsyncpa [#allocation6], 1
    %2166 = vsyncpa [#allocation9], 1
    %2167 = vsyncpa [#allocation4], 1

</llo_original>
